<compile_context>
chip_gen: v7x
topology: tpu7x:2x2x1
jax: 0.10.0
libtpu: 0.0.40
codegen_flags: <defaults>
</compile_context>

<pallas_src>
import math
import functools

import jax
import jax.numpy as jnp
from jax import lax
from jax.experimental import pallas as pl
from jax.experimental.pallas import tpu as pltpu


def _attention_kernel(x_ref, mrow_ref, mcol_ref,
                      wq_ref, bq_ref, wk_ref, bk_ref, wv_ref, bv_ref,
                      wo_ref, bo_ref, o_ref, *,
                      num_heads: int, head_dim: int, scale: float, eps: float):
    # x_ref: (1, n, d); weights: (d, d); biases: (1, d); masks: (1,1,n) / (1,n,1)
    x = x_ref[0]                                   # (n, d) f32
    n, d = x.shape

    # QKV projections (MXU, f32 accumulation).
    q = jnp.dot(x, wq_ref[...], preferred_element_type=jnp.float32) + bq_ref[...]
    k = jnp.dot(x, wk_ref[...], preferred_element_type=jnp.float32) + bk_ref[...]
    v = jnp.dot(x, wv_ref[...], preferred_element_type=jnp.float32) + bv_ref[...]

    # Additive key-mask bias (True = keep, False = masked). Finite large-negative
    # instead of -inf so fully-masked rows stay finite (they are zeroed below anyway).
    key_bias = jnp.where(mrow_ref[0] > 0.5,
                         jnp.float32(0.0), jnp.float32(-1e30))        # (1, n)

    def _layernorm(t):
        mu = jnp.mean(t, axis=-1, keepdims=True)
        c = t - mu
        var = jnp.mean(c * c, axis=-1, keepdims=True)
        return c * lax.rsqrt(var + eps)

    wo = wo_ref[...]                               # (d, d), loaded once
    acc = jnp.zeros((n, d), jnp.float32)

    for h in range(num_heads):                     # static unrolled head loop
        sl = slice(h * head_dim, (h + 1) * head_dim)
        qh = _layernorm(q[:, sl])                  # (n, hd)
        kh = _layernorm(k[:, sl])                  # (n, hd)
        vh = v[:, sl]                              # (n, hd)

        # scores = qh @ kh^T  (contract over head_dim, no explicit transpose)
        s = lax.dot_general(qh, kh, (((1,), (1,)), ((), ())),
                            preferred_element_type=jnp.float32)        # (n, n)
        s = s * scale + key_bias

        s = s - jnp.max(s, axis=-1, keepdims=True)
        p = jnp.exp(s)
        p = p / jnp.sum(p, axis=-1, keepdims=True)

        oh = jnp.dot(p, vh, preferred_element_type=jnp.float32)        # (n, hd)
        # Output projection decomposed per head: concat(o_h) @ Wo == sum_h o_h @ Wo[rows_h]
        acc = acc + jnp.dot(oh, wo[sl, :], preferred_element_type=jnp.float32)

    out = (acc + bo_ref[...]) * mcol_ref[0]        # add bias, zero masked query rows
    o_ref[0] = out.astype(o_ref.dtype)


def attention_forward(x, mask, wq, bq, wk, bk, wv, bv, wo, bo, *,
                      head_dim: int = 64, eps: float = 1e-6):
    """x: (b, n, d) f32; mask: (b, n) bool or None; weights as (d, d) with y = x @ W + b."""
    b, n, d = x.shape
    assert d % head_dim == 0
    num_heads = d // head_dim
    scale = 1.0 / d                                # matches self.scale = 1 / dim

    if mask is None:
        mask = jnp.ones((b, n), dtype=bool)
    mrow = mask.astype(jnp.float32).reshape(b, 1, n)   # key-axis mask
    mcol = mask.astype(jnp.float32).reshape(b, n, 1)   # query-row zeroing mask

    kernel = functools.partial(
        _attention_kernel,
        num_heads=num_heads, head_dim=head_dim, scale=scale, eps=eps)

    return pl.pallas_call(
        kernel,
        out_shape=jax.ShapeDtypeStruct((b, n, d), x.dtype),
        grid=(b,),
        in_specs=[
            pl.BlockSpec((1, n, d), lambda i: (i, 0, 0)),   # x
            pl.BlockSpec((1, 1, n), lambda i: (i, 0, 0)),   # mask (row layout)
            pl.BlockSpec((1, n, 1), lambda i: (i, 0, 0)),   # mask (col layout)
            pl.BlockSpec((d, d), lambda i: (0, 0)),         # Wq
            pl.BlockSpec((1, d), lambda i: (0, 0)),         # bq
            pl.BlockSpec((d, d), lambda i: (0, 0)),         # Wk
            pl.BlockSpec((1, d), lambda i: (0, 0)),         # bk
            pl.BlockSpec((d, d), lambda i: (0, 0)),         # Wv
            pl.BlockSpec((1, d), lambda i: (0, 0)),         # bv
            pl.BlockSpec((d, d), lambda i: (0, 0)),         # Wo
            pl.BlockSpec((1, d), lambda i: (0, 0)),         # bo
        ],
        out_specs=pl.BlockSpec((1, n, d), lambda i: (i, 0, 0)),
        compiler_params=pltpu.CompilerParams(
            dimension_semantics=("parallel",),
        ),
    )(x, mrow, mcol, wq, bq, wk, bk, wv, bv, wo, bo)


def _reference(x, mask, wq, bq, wk, bk, wv, bv, wo, bo, *,
               head_dim: int = 64, eps: float = 1e-6):
    b, n, d = x.shape
    num_heads = d // head_dim
    scale = 1.0 / d

    if mask is None:
        mask = jnp.ones((b, n), dtype=bool)

    q = x @ wq + bq
    k = x @ wk + bk
    v = x @ wv + bv

    def split(t):
        return t.reshape(b, n, num_heads, head_dim).transpose(0, 2, 1, 3)

    q, k, v = split(q), split(k), split(v)

    def ln(t):
        mu = t.mean(-1, keepdims=True)
        c = t - mu
        var = (c * c).mean(-1, keepdims=True)
        return c / jnp.sqrt(var + eps)

    q = ln(q)
    k = ln(k)

    s = jnp.einsum('bhqe,bhke->bhqk', q, k) * scale
    bias = jnp.where(mask[:, None, None, :], 0.0, -1e30)
    p = jax.nn.softmax(s + bias, axis=-1)
    o = jnp.einsum('bhqk,bhke->bhqe', p, v)
    o = o.transpose(0, 2, 1, 3).reshape(b, n, d)
    o = o @ wo + bo.reshape(d)
    o = jnp.where(mask[:, :, None], o, 0.0)
    return o


if __name__ == "__main__":
    key = jax.random.PRNGKey(0)
    b, n, d, head_dim = 2, 16, 128, 64

    ks = jax.random.split(key, 10)
    x = jax.random.normal(ks[0], (b, n, d), jnp.float32)

    wscale = 1.0 / math.sqrt(d)
    wq = jax.random.normal(ks[1], (d, d), jnp.float32) * wscale
    wk = jax.random.normal(ks[2], (d, d), jnp.float32) * wscale
    wv = jax.random.normal(ks[3], (d, d), jnp.float32) * wscale
    wo = jax.random.normal(ks[4], (d, d), jnp.float32) * wscale
    bq = jax.random.normal(ks[5], (1, d), jnp.float32) * 0.1
    bk = jax.random.normal(ks[6], (1, d), jnp.float32) * 0.1
    bv = jax.random.normal(ks[7], (1, d), jnp.float32) * 0.1
    bo = jax.random.normal(ks[8], (1, d), jnp.float32) * 0.1

    # Padding mask: first sequence fully valid, second padded after position 10.
    lengths = jnp.array([n, 11], dtype=jnp.int32)
    mask = jnp.arange(n, dtype=jnp.int32)[None, :] < lengths[:, None]   # (b, n) bool

    out = attention_forward(x, mask, wq, bq, wk, bk, wv, bv, wo, bo,
                            head_dim=head_dim)
    out = jax.block_until_ready(out)

    ref = _reference(x, mask, wq, bq, wk, bk, wv, bv, wo, bo, head_dim=head_dim)

    assert out.shape == (b, n, d), out.shape
    max_err = float(jnp.max(jnp.abs(out - ref)))
    assert jnp.allclose(out, ref, atol=2e-2, rtol=2e-2), max_err

    print("KERNEL_OK")
</pallas_src>

<mosaic_0001>
module attributes {stable_mosaic.version = 11 : i64} {
  func.func @_attention_kernel(%arg0: i32, %arg1: memref<1x16x128xf32, #tpu.memory_space<vmem>>, %arg2: memref<1x1x16xf32, #tpu.memory_space<vmem>>, %arg3: memref<1x16x1xf32, #tpu.memory_space<vmem>>, %arg4: memref<128x128xf32, #tpu.memory_space<vmem>>, %arg5: memref<1x128xf32, #tpu.memory_space<vmem>>, %arg6: memref<128x128xf32, #tpu.memory_space<vmem>>, %arg7: memref<1x128xf32, #tpu.memory_space<vmem>>, %arg8: memref<128x128xf32, #tpu.memory_space<vmem>>, %arg9: memref<1x128xf32, #tpu.memory_space<vmem>>, %arg10: memref<128x128xf32, #tpu.memory_space<vmem>>, %arg11: memref<1x128xf32, #tpu.memory_space<vmem>>, %arg12: memref<1x16x128xf32, #tpu.memory_space<vmem>>) attributes {dimension_semantics = [#tpu.dimension_semantics<parallel>], iteration_bounds = array<i64: 2>, scalar_prefetch = 0 : i64, scratch_operands = 0 : i64, tpu.core_type = #tpu.core_type<tc>, window_params = [{transform_indices = @transform_0, window_bounds = array<i64: 1, 16, 128>}, {transform_indices = @transform_1, window_bounds = array<i64: 1, 1, 16>}, {transform_indices = @transform_2, window_bounds = array<i64: 1, 16, 1>}, {pipeline_mode = #tpu.pipeline_mode<synchronous>, transform_indices = @transform_3, window_bounds = array<i64: 128, 128>}, {pipeline_mode = #tpu.pipeline_mode<synchronous>, transform_indices = @transform_4, window_bounds = array<i64: 1, 128>}, {pipeline_mode = #tpu.pipeline_mode<synchronous>, transform_indices = @transform_5, window_bounds = array<i64: 128, 128>}, {pipeline_mode = #tpu.pipeline_mode<synchronous>, transform_indices = @transform_6, window_bounds = array<i64: 1, 128>}, {pipeline_mode = #tpu.pipeline_mode<synchronous>, transform_indices = @transform_7, window_bounds = array<i64: 128, 128>}, {pipeline_mode = #tpu.pipeline_mode<synchronous>, transform_indices = @transform_8, window_bounds = array<i64: 1, 128>}, {pipeline_mode = #tpu.pipeline_mode<synchronous>, transform_indices = @transform_9, window_bounds = array<i64: 128, 128>}, {pipeline_mode = #tpu.pipeline_mode<synchronous>, transform_indices = @transform_10, window_bounds = array<i64: 1, 128>}, {transform_indices = @transform_11, window_bounds = array<i64: 1, 16, 128>}]} {
    %c0 = arith.constant 0 : index
    %c0_0 = arith.constant 0 : index
    %c0_1 = arith.constant 0 : index
    %0 = vector.load %arg1[%c0, %c0_0, %c0_1] : memref<1x16x128xf32, #tpu.memory_space<vmem>>, vector<1x16x128xf32>
    %1 = vector.shape_cast %0 : vector<1x16x128xf32> to vector<16x128xf32>
    %c0_2 = arith.constant 0 : index
    %c0_3 = arith.constant 0 : index
    %2 = vector.load %arg4[%c0_2, %c0_3] : memref<128x128xf32, #tpu.memory_space<vmem>>, vector<128x128xf32>
    %cst = arith.constant dense<0.000000e+00> : vector<16x128xf32>
    %3 = tpu.matmul %1, %2, %cst {dimension_numbers = #tpu.dot_dimension_numbers<[1], [0], [0], [1], [0, 0, 1, 1], [], []>} : vector<16x128xf32>, vector<128x128xf32>, vector<16x128xf32> -> vector<16x128xf32>
    %c0_4 = arith.constant 0 : index
    %c0_5 = arith.constant 0 : index
    %4 = vector.load %arg5[%c0_4, %c0_5] : memref<1x128xf32, #tpu.memory_space<vmem>>, vector<1x128xf32>
    %5 = vector.broadcast %4 : vector<1x128xf32> to vector<16x128xf32>
    %6 = arith.addf %3, %5 : vector<16x128xf32>
    %c0_6 = arith.constant 0 : index
    %c0_7 = arith.constant 0 : index
    %7 = vector.load %arg6[%c0_6, %c0_7] : memref<128x128xf32, #tpu.memory_space<vmem>>, vector<128x128xf32>
    %cst_8 = arith.constant dense<0.000000e+00> : vector<16x128xf32>
    %8 = tpu.matmul %1, %7, %cst_8 {dimension_numbers = #tpu.dot_dimension_numbers<[1], [0], [0], [1], [0, 0, 1, 1], [], []>} : vector<16x128xf32>, vector<128x128xf32>, vector<16x128xf32> -> vector<16x128xf32>
    %c0_9 = arith.constant 0 : index
    %c0_10 = arith.constant 0 : index
    %9 = vector.load %arg7[%c0_9, %c0_10] : memref<1x128xf32, #tpu.memory_space<vmem>>, vector<1x128xf32>
    %10 = vector.broadcast %9 : vector<1x128xf32> to vector<16x128xf32>
    %11 = arith.addf %8, %10 : vector<16x128xf32>
    %c0_11 = arith.constant 0 : index
    %c0_12 = arith.constant 0 : index
    %12 = vector.load %arg8[%c0_11, %c0_12] : memref<128x128xf32, #tpu.memory_space<vmem>>, vector<128x128xf32>
    %cst_13 = arith.constant dense<0.000000e+00> : vector<16x128xf32>
    %13 = tpu.matmul %1, %12, %cst_13 {dimension_numbers = #tpu.dot_dimension_numbers<[1], [0], [0], [1], [0, 0, 1, 1], [], []>} : vector<16x128xf32>, vector<128x128xf32>, vector<16x128xf32> -> vector<16x128xf32>
    %c0_14 = arith.constant 0 : index
    %c0_15 = arith.constant 0 : index
    %14 = vector.load %arg9[%c0_14, %c0_15] : memref<1x128xf32, #tpu.memory_space<vmem>>, vector<1x128xf32>
    %15 = vector.broadcast %14 : vector<1x128xf32> to vector<16x128xf32>
    %16 = arith.addf %13, %15 : vector<16x128xf32>
    %c0_16 = arith.constant 0 : index
    %c0_17 = arith.constant 0 : index
    %c0_18 = arith.constant 0 : index
    %17 = vector.load %arg2[%c0_16, %c0_17, %c0_18] : memref<1x1x16xf32, #tpu.memory_space<vmem>>, vector<1x1x16xf32>
    %18 = vector.shape_cast %17 : vector<1x1x16xf32> to vector<1x16xf32>
    %cst_19 = arith.constant 5.000000e-01 : f32
    %19 = vector.broadcast %cst_19 : f32 to vector<1x16xf32>
    %20 = arith.cmpf ogt, %18, %19 : vector<1x16xf32>
    %cst_20 = arith.constant 0.000000e+00 : f32
    %cst_21 = arith.constant -1.000000e+30 : f32
    %21 = vector.broadcast %cst_20 : f32 to vector<1x16xf32>
    %22 = vector.broadcast %cst_21 : f32 to vector<1x16xf32>
    %23 = arith.select %20, %21, %22 : vector<1x16xi1>, vector<1x16xf32>
    %c0_22 = arith.constant 0 : index
    %c0_23 = arith.constant 0 : index
    %24 = vector.load %arg10[%c0_22, %c0_23] : memref<128x128xf32, #tpu.memory_space<vmem>>, vector<128x128xf32>
    %cst_24 = arith.constant 0.000000e+00 : f32
    %25 = vector.broadcast %cst_24 : f32 to vector<16x128xf32>
    %26 = vector.extract_strided_slice %6 {offsets = [0, 0], sizes = [16, 64], strides = [1, 1]} : vector<16x128xf32> to vector<16x64xf32>
    %cst_25 = arith.constant dense<0.000000e+00> : vector<16xf32>
    %27 = vector.multi_reduction <add>, %26, %cst_25 [1] : vector<16x64xf32> to vector<16xf32>
    %28 = vector.shape_cast %27 : vector<16xf32> to vector<16x1xf32>
    %cst_26 = arith.constant 6.400000e+01 : f32
    %29 = vector.broadcast %cst_26 : f32 to vector<16x1xf32>
    %30 = arith.divf %28, %29 : vector<16x1xf32>
    %31 = vector.broadcast %30 : vector<16x1xf32> to vector<16x64xf32>
    %32 = arith.subf %26, %31 : vector<16x64xf32>
    %33 = arith.mulf %32, %32 : vector<16x64xf32>
    %cst_27 = arith.constant dense<0.000000e+00> : vector<16xf32>
    %34 = vector.multi_reduction <add>, %33, %cst_27 [1] : vector<16x64xf32> to vector<16xf32>
    %35 = vector.shape_cast %34 : vector<16xf32> to vector<16x1xf32>
    %cst_28 = arith.constant 6.400000e+01 : f32
    %36 = vector.broadcast %cst_28 : f32 to vector<16x1xf32>
    %37 = arith.divf %35, %36 : vector<16x1xf32>
    %cst_29 = arith.constant 9.99999997E-7 : f32
    %38 = vector.broadcast %cst_29 : f32 to vector<16x1xf32>
    %39 = arith.addf %37, %38 : vector<16x1xf32>
    %40 = math.rsqrt %39 : vector<16x1xf32>
    %41 = vector.broadcast %40 : vector<16x1xf32> to vector<16x64xf32>
    %42 = arith.mulf %32, %41 : vector<16x64xf32>
    %43 = vector.extract_strided_slice %11 {offsets = [0, 0], sizes = [16, 64], strides = [1, 1]} : vector<16x128xf32> to vector<16x64xf32>
    %cst_30 = arith.constant dense<0.000000e+00> : vector<16xf32>
    %44 = vector.multi_reduction <add>, %43, %cst_30 [1] : vector<16x64xf32> to vector<16xf32>
    %45 = vector.shape_cast %44 : vector<16xf32> to vector<16x1xf32>
    %cst_31 = arith.constant 6.400000e+01 : f32
    %46 = vector.broadcast %cst_31 : f32 to vector<16x1xf32>
    %47 = arith.divf %45, %46 : vector<16x1xf32>
    %48 = vector.broadcast %47 : vector<16x1xf32> to vector<16x64xf32>
    %49 = arith.subf %43, %48 : vector<16x64xf32>
    %50 = arith.mulf %49, %49 : vector<16x64xf32>
    %cst_32 = arith.constant dense<0.000000e+00> : vector<16xf32>
    %51 = vector.multi_reduction <add>, %50, %cst_32 [1] : vector<16x64xf32> to vector<16xf32>
    %52 = vector.shape_cast %51 : vector<16xf32> to vector<16x1xf32>
    %cst_33 = arith.constant 6.400000e+01 : f32
    %53 = vector.broadcast %cst_33 : f32 to vector<16x1xf32>
    %54 = arith.divf %52, %53 : vector<16x1xf32>
    %cst_34 = arith.constant 9.99999997E-7 : f32
    %55 = vector.broadcast %cst_34 : f32 to vector<16x1xf32>
    %56 = arith.addf %54, %55 : vector<16x1xf32>
    %57 = math.rsqrt %56 : vector<16x1xf32>
    %58 = vector.broadcast %57 : vector<16x1xf32> to vector<16x64xf32>
    %59 = arith.mulf %49, %58 : vector<16x64xf32>
    %60 = vector.extract_strided_slice %16 {offsets = [0, 0], sizes = [16, 64], strides = [1, 1]} : vector<16x128xf32> to vector<16x64xf32>
    %cst_35 = arith.constant dense<0.000000e+00> : vector<16x16xf32>
    %61 = tpu.matmul %42, %59, %cst_35 {dimension_numbers = #tpu.dot_dimension_numbers<[1], [1], [0], [0], [0, 0, 1, 0], [], []>} : vector<16x64xf32>, vector<16x64xf32>, vector<16x16xf32> -> vector<16x16xf32>
    %cst_36 = arith.constant 7.812500e-03 : f32
    %62 = vector.broadcast %cst_36 : f32 to vector<16x16xf32>
    %63 = arith.mulf %61, %62 : vector<16x16xf32>
    %64 = vector.broadcast %23 : vector<1x16xf32> to vector<16x16xf32>
    %65 = arith.addf %63, %64 : vector<16x16xf32>
    %cst_37 = arith.constant dense<0xFF800000> : vector<16xf32>
    %66 = vector.multi_reduction <maximumf>, %65, %cst_37 [1] : vector<16x16xf32> to vector<16xf32>
    %67 = vector.shape_cast %66 : vector<16xf32> to vector<16x1xf32>
    %68 = vector.broadcast %67 : vector<16x1xf32> to vector<16x16xf32>
    %69 = arith.subf %65, %68 : vector<16x16xf32>
    %70 = math.exp %69 : vector<16x16xf32>
    %cst_38 = arith.constant dense<0.000000e+00> : vector<16xf32>
    %71 = vector.multi_reduction <add>, %70, %cst_38 [1] : vector<16x16xf32> to vector<16xf32>
    %72 = vector.shape_cast %71 : vector<16xf32> to vector<16x1xf32>
    %73 = vector.broadcast %72 : vector<16x1xf32> to vector<16x16xf32>
    %74 = arith.divf %70, %73 : vector<16x16xf32>
    %cst_39 = arith.constant dense<0.000000e+00> : vector<16x64xf32>
    %75 = tpu.matmul %74, %60, %cst_39 {dimension_numbers = #tpu.dot_dimension_numbers<[1], [0], [0], [1], [0, 0, 1, 1], [], []>} : vector<16x16xf32>, vector<16x64xf32>, vector<16x64xf32> -> vector<16x64xf32>
    %76 = vector.extract_strided_slice %24 {offsets = [0, 0], sizes = [64, 128], strides = [1, 1]} : vector<128x128xf32> to vector<64x128xf32>
    %cst_40 = arith.constant dense<0.000000e+00> : vector<16x128xf32>
    %77 = tpu.matmul %75, %76, %cst_40 {dimension_numbers = #tpu.dot_dimension_numbers<[1], [0], [0], [1], [0, 0, 1, 1], [], []>} : vector<16x64xf32>, vector<64x128xf32>, vector<16x128xf32> -> vector<16x128xf32>
    %78 = arith.addf %25, %77 : vector<16x128xf32>
    %79 = vector.extract_strided_slice %6 {offsets = [0, 64], sizes = [16, 64], strides = [1, 1]} : vector<16x128xf32> to vector<16x64xf32>
    %cst_41 = arith.constant dense<0.000000e+00> : vector<16xf32>
    %80 = vector.multi_reduction <add>, %79, %cst_41 [1] : vector<16x64xf32> to vector<16xf32>
    %81 = vector.shape_cast %80 : vector<16xf32> to vector<16x1xf32>
    %cst_42 = arith.constant 6.400000e+01 : f32
    %82 = vector.broadcast %cst_42 : f32 to vector<16x1xf32>
    %83 = arith.divf %81, %82 : vector<16x1xf32>
    %84 = vector.broadcast %83 : vector<16x1xf32> to vector<16x64xf32>
    %85 = arith.subf %79, %84 : vector<16x64xf32>
    %86 = arith.mulf %85, %85 : vector<16x64xf32>
    %cst_43 = arith.constant dense<0.000000e+00> : vector<16xf32>
    %87 = vector.multi_reduction <add>, %86, %cst_43 [1] : vector<16x64xf32> to vector<16xf32>
    %88 = vector.shape_cast %87 : vector<16xf32> to vector<16x1xf32>
    %cst_44 = arith.constant 6.400000e+01 : f32
    %89 = vector.broadcast %cst_44 : f32 to vector<16x1xf32>
    %90 = arith.divf %88, %89 : vector<16x1xf32>
    %cst_45 = arith.constant 9.99999997E-7 : f32
    %91 = vector.broadcast %cst_45 : f32 to vector<16x1xf32>
    %92 = arith.addf %90, %91 : vector<16x1xf32>
    %93 = math.rsqrt %92 : vector<16x1xf32>
    %94 = vector.broadcast %93 : vector<16x1xf32> to vector<16x64xf32>
    %95 = arith.mulf %85, %94 : vector<16x64xf32>
    %96 = vector.extract_strided_slice %11 {offsets = [0, 64], sizes = [16, 64], strides = [1, 1]} : vector<16x128xf32> to vector<16x64xf32>
    %cst_46 = arith.constant dense<0.000000e+00> : vector<16xf32>
    %97 = vector.multi_reduction <add>, %96, %cst_46 [1] : vector<16x64xf32> to vector<16xf32>
    %98 = vector.shape_cast %97 : vector<16xf32> to vector<16x1xf32>
    %cst_47 = arith.constant 6.400000e+01 : f32
    %99 = vector.broadcast %cst_47 : f32 to vector<16x1xf32>
    %100 = arith.divf %98, %99 : vector<16x1xf32>
    %101 = vector.broadcast %100 : vector<16x1xf32> to vector<16x64xf32>
    %102 = arith.subf %96, %101 : vector<16x64xf32>
    %103 = arith.mulf %102, %102 : vector<16x64xf32>
    %cst_48 = arith.constant dense<0.000000e+00> : vector<16xf32>
    %104 = vector.multi_reduction <add>, %103, %cst_48 [1] : vector<16x64xf32> to vector<16xf32>
    %105 = vector.shape_cast %104 : vector<16xf32> to vector<16x1xf32>
    %cst_49 = arith.constant 6.400000e+01 : f32
    %106 = vector.broadcast %cst_49 : f32 to vector<16x1xf32>
    %107 = arith.divf %105, %106 : vector<16x1xf32>
    %cst_50 = arith.constant 9.99999997E-7 : f32
    %108 = vector.broadcast %cst_50 : f32 to vector<16x1xf32>
    %109 = arith.addf %107, %108 : vector<16x1xf32>
    %110 = math.rsqrt %109 : vector<16x1xf32>
    %111 = vector.broadcast %110 : vector<16x1xf32> to vector<16x64xf32>
    %112 = arith.mulf %102, %111 : vector<16x64xf32>
    %113 = vector.extract_strided_slice %16 {offsets = [0, 64], sizes = [16, 64], strides = [1, 1]} : vector<16x128xf32> to vector<16x64xf32>
    %cst_51 = arith.constant dense<0.000000e+00> : vector<16x16xf32>
    %114 = tpu.matmul %95, %112, %cst_51 {dimension_numbers = #tpu.dot_dimension_numbers<[1], [1], [0], [0], [0, 0, 1, 0], [], []>} : vector<16x64xf32>, vector<16x64xf32>, vector<16x16xf32> -> vector<16x16xf32>
    %cst_52 = arith.constant 7.812500e-03 : f32
    %115 = vector.broadcast %cst_52 : f32 to vector<16x16xf32>
    %116 = arith.mulf %114, %115 : vector<16x16xf32>
    %117 = vector.broadcast %23 : vector<1x16xf32> to vector<16x16xf32>
    %118 = arith.addf %116, %117 : vector<16x16xf32>
    %cst_53 = arith.constant dense<0xFF800000> : vector<16xf32>
    %119 = vector.multi_reduction <maximumf>, %118, %cst_53 [1] : vector<16x16xf32> to vector<16xf32>
    %120 = vector.shape_cast %119 : vector<16xf32> to vector<16x1xf32>
    %121 = vector.broadcast %120 : vector<16x1xf32> to vector<16x16xf32>
    %122 = arith.subf %118, %121 : vector<16x16xf32>
    %123 = math.exp %122 : vector<16x16xf32>
    %cst_54 = arith.constant dense<0.000000e+00> : vector<16xf32>
    %124 = vector.multi_reduction <add>, %123, %cst_54 [1] : vector<16x16xf32> to vector<16xf32>
    %125 = vector.shape_cast %124 : vector<16xf32> to vector<16x1xf32>
    %126 = vector.broadcast %125 : vector<16x1xf32> to vector<16x16xf32>
    %127 = arith.divf %123, %126 : vector<16x16xf32>
    %cst_55 = arith.constant dense<0.000000e+00> : vector<16x64xf32>
    %128 = tpu.matmul %127, %113, %cst_55 {dimension_numbers = #tpu.dot_dimension_numbers<[1], [0], [0], [1], [0, 0, 1, 1], [], []>} : vector<16x16xf32>, vector<16x64xf32>, vector<16x64xf32> -> vector<16x64xf32>
    %129 = vector.extract_strided_slice %24 {offsets = [64, 0], sizes = [64, 128], strides = [1, 1]} : vector<128x128xf32> to vector<64x128xf32>
    %cst_56 = arith.constant dense<0.000000e+00> : vector<16x128xf32>
    %130 = tpu.matmul %128, %129, %cst_56 {dimension_numbers = #tpu.dot_dimension_numbers<[1], [0], [0], [1], [0, 0, 1, 1], [], []>} : vector<16x64xf32>, vector<64x128xf32>, vector<16x128xf32> -> vector<16x128xf32>
    %131 = arith.addf %78, %130 : vector<16x128xf32>
    %c0_57 = arith.constant 0 : index
    %c0_58 = arith.constant 0 : index
    %132 = vector.load %arg11[%c0_57, %c0_58] : memref<1x128xf32, #tpu.memory_space<vmem>>, vector<1x128xf32>
    %133 = vector.broadcast %132 : vector<1x128xf32> to vector<16x128xf32>
    %134 = arith.addf %131, %133 : vector<16x128xf32>
    %c0_59 = arith.constant 0 : index
    %c0_60 = arith.constant 0 : index
    %c0_61 = arith.constant 0 : index
    %135 = vector.load %arg3[%c0_59, %c0_60, %c0_61] : memref<1x16x1xf32, #tpu.memory_space<vmem>>, vector<1x16x1xf32>
    %136 = vector.shape_cast %135 : vector<1x16x1xf32> to vector<16x1xf32>
    %137 = vector.broadcast %136 : vector<16x1xf32> to vector<16x128xf32>
    %138 = arith.mulf %134, %137 : vector<16x128xf32>
    %c0_62 = arith.constant 0 : index
    %c0_63 = arith.constant 0 : index
    %c0_64 = arith.constant 0 : index
    %139 = vector.load %arg12[%c0_62, %c0_63, %c0_64] : memref<1x16x128xf32, #tpu.memory_space<vmem>>, vector<1x16x128xf32>
    %140 = vector.shape_cast %139 : vector<1x16x128xf32> to vector<16x128xf32>
    %141 = vector.shape_cast %138 : vector<16x128xf32> to vector<1x16x128xf32>
    tpu.vector_store %arg12[%c0_62, %c0_63, %c0_64], %141 {strides = array<i32>} : memref<1x16x128xf32, #tpu.memory_space<vmem>>, vector<1x16x128xf32>,
    return
  }
  func.func @transform_0(%arg0: i32) -> (i32, i32, i32) {
    %c0_i32 = arith.constant 0 : i32
    %c0_i32_0 = arith.constant 0 : i32
    %c0_i32_1 = arith.constant 0 : i32
    return %arg0, %c0_i32, %c0_i32_0 : i32, i32, i32
  }
  func.func @transform_1(%arg0: i32) -> (i32, i32, i32) {
    %c0_i32 = arith.constant 0 : i32
    %c0_i32_0 = arith.constant 0 : i32
    %c0_i32_1 = arith.constant 0 : i32
    return %arg0, %c0_i32, %c0_i32_0 : i32, i32, i32
  }
  func.func @transform_2(%arg0: i32) -> (i32, i32, i32) {
    %c0_i32 = arith.constant 0 : i32
    %c0_i32_0 = arith.constant 0 : i32
    %c0_i32_1 = arith.constant 0 : i32
    return %arg0, %c0_i32, %c0_i32_0 : i32, i32, i32
  }
  func.func @transform_3(%arg0: i32) -> (i32, i32) {
    %c0_i32 = arith.constant 0 : i32
    %c0_i32_0 = arith.constant 0 : i32
    %c0_i32_1 = arith.constant 0 : i32
    return %c0_i32, %c0_i32_0 : i32, i32
  }
  func.func @transform_4(%arg0: i32) -> (i32, i32) {
    %c0_i32 = arith.constant 0 : i32
    %c0_i32_0 = arith.constant 0 : i32
    %c0_i32_1 = arith.constant 0 : i32
    return %c0_i32, %c0_i32_0 : i32, i32
  }
  func.func @transform_5(%arg0: i32) -> (i32, i32) {
    %c0_i32 = arith.constant 0 : i32
    %c0_i32_0 = arith.constant 0 : i32
    %c0_i32_1 = arith.constant 0 : i32
    return %c0_i32, %c0_i32_0 : i32, i32
  }
  func.func @transform_6(%arg0: i32) -> (i32, i32) {
    %c0_i32 = arith.constant 0 : i32
    %c0_i32_0 = arith.constant 0 : i32
    %c0_i32_1 = arith.constant 0 : i32
    return %c0_i32, %c0_i32_0 : i32, i32
  }
  func.func @transform_7(%arg0: i32) -> (i32, i32) {
    %c0_i32 = arith.constant 0 : i32
    %c0_i32_0 = arith.constant 0 : i32
    %c0_i32_1 = arith.constant 0 : i32
    return %c0_i32, %c0_i32_0 : i32, i32
  }
  func.func @transform_8(%arg0: i32) -> (i32, i32) {
    %c0_i32 = arith.constant 0 : i32
    %c0_i32_0 = arith.constant 0 : i32
    %c0_i32_1 = arith.constant 0 : i32
    return %c0_i32, %c0_i32_0 : i32, i32
  }
  func.func @transform_9(%arg0: i32) -> (i32, i32) {
    %c0_i32 = arith.constant 0 : i32
    %c0_i32_0 = arith.constant 0 : i32
    %c0_i32_1 = arith.constant 0 : i32
    return %c0_i32, %c0_i32_0 : i32, i32
  }
  func.func @transform_10(%arg0: i32) -> (i32, i32) {
    %c0_i32 = arith.constant 0 : i32
    %c0_i32_0 = arith.constant 0 : i32
    %c0_i32_1 = arith.constant 0 : i32
    return %c0_i32, %c0_i32_0 : i32, i32
  }
  func.func @transform_11(%arg0: i32) -> (i32, i32, i32) {
    %c0_i32 = arith.constant 0 : i32
    %c0_i32_0 = arith.constant 0 : i32
    %c0_i32_1 = arith.constant 0 : i32
    return %arg0, %c0_i32, %c0_i32_0 : i32, i32, i32
  }
}

</mosaic_0001>

<llo_original>
// kernel: tpu_custom_call.1
$region0: #{tpu_custom_call.1}
  #allocation0 [shape = 'u32[]', space=smem, size = 0x4, offset = 0x4, fixed_abs, tag = 'smem constant byte address 0x4 - core index']
  #allocation1 [shape = 'u32[144,128]{1,0:T(1,128)}', space=vmem, size = 0x12000, scoped, tag = 'internal scratch']
  %s0 = inlined_call_operand.vmem [shape: f32[2,16,128], index: 0, kind: input, shape index: {}]
  %s1 = inlined_call_operand.vmem [shape: f32[2,1,16], index: 1, kind: input, shape index: {}]
  %s2 = inlined_call_operand.vmem [shape: f32[2,16,1], index: 2, kind: input, shape index: {}]
  %s3 = inlined_call_operand.hbm [shape: f32[128,128], index: 3, kind: input, shape index: {}]
  %s4 = inlined_call_operand.vmem [shape: f32[1,128], index: 4, kind: input, shape index: {}]
  %s5 = inlined_call_operand.hbm [shape: f32[128,128], index: 5, kind: input, shape index: {}]
  %s6 = inlined_call_operand.vmem [shape: f32[1,128], index: 6, kind: input, shape index: {}]
  %s7 = inlined_call_operand.hbm [shape: f32[128,128], index: 7, kind: input, shape index: {}]
  %s8 = inlined_call_operand.vmem [shape: f32[1,128], index: 8, kind: input, shape index: {}]
  %s9 = inlined_call_operand.hbm [shape: f32[128,128], index: 9, kind: input, shape index: {}]
  %s10 = inlined_call_operand.vmem [shape: f32[1,128], index: 10, kind: input, shape index: {}]
  %s11 = inlined_call_operand.hbm [shape: f32[2,16,128], index: 11, kind: output, shape index: {}]
  %s12 = sld [smem:[#allocation0]]
  $region93: #{tpu_custom_call.1} parent=0
    _
  %s14 = ssub.s32 1, %s12
  %s15 = scalar_select 0, %s14, %s12
  $region1: #{tpu_custom_call.1} parent=0
    #allocation2 [shape = 'u8[65536]{0}', space=vmem, size = 0x10000, scoped, tag = 'input window, operand 3, single buffered']
    #allocation3 [shape = 's32[2]{0}', space=sflag, size = 0x8, scoped, tag = 'scoped memory for tpu_custom_call.1']
    #allocation4 [shape = 's32[2]{0}', space=sflag, size = 0x8, scoped, tag = 'scoped memory for tpu_custom_call.1']
    #allocation5 [shape = 'u8[65536]{0}', space=vmem, size = 0x10000, scoped, tag = 'input window, operand 5, single buffered']
    #allocation6 [shape = 's32[1]{0}', space=sflag, size = 0x4, scoped, tag = 'scoped memory for tpu_custom_call.1']
    #allocation7 [shape = 'u8[65536]{0}', space=vmem, size = 0x10000, scoped, tag = 'input window, operand 7, single buffered']
    #allocation8 [shape = 'u8[65536]{0}', space=vmem, size = 0x10000, scoped, tag = 'input window, operand 9, single buffered']
    #allocation9 [shape = 's32[1]{0}', space=sflag, size = 0x4, scoped, tag = 'scoped memory for tpu_custom_call.1']
    #allocation10 [shape = 'u8[16384]{0}', space=vmem, size = 0x4000, scoped, tag = 'output window, operand 0']
    %16 = vsyncpa [#allocation3], 0
    %17 = vsyncpa [#allocation6], 0
    %18 = vsyncpa [#allocation9], 0
    %19 = vsyncpa [#allocation4], 0
    %s20 = scalar_lea.sflag [#allocation4], 1
    %21 = vsyncpa %s20, 0
    loop: start=0, step=1, limit=4
    $region2: #{tpu_custom_call.1} parent=1 // loop_pre_header
      _
    $region3: #{tpu_custom_call.1} parent=1 // loop_header
      %s23 = sphi 0, %s27
      %p24 = scmp.ge.s32.totalorder %s23, 4
      %s33 = sphi 0, %s35
      %s36 = sphi 0, %s33
      %s37 = sphi 0, %s36
      %s53 = sphi 0, %s37
      %s59 = sphi 0, %s61
      %s62 = sphi 0, %s59
      %s63 = sphi 0, %s62
      %s79 = sphi 0, %s63
      %s85 = sphi 0, %s87
      %s88 = sphi 0, %s85
      %s89 = sphi 0, %s88
      %s105 = sphi 0, %s89
      %s109 = sphi 0, %s109
      %s111 = sphi 0, %s109
      %s112 = sphi 0, %s111
      %s126 = sphi 0, %s112
      %s130 = sphi 0, %s130
      %s132 = sphi 0, %s130
      %s133 = sphi 0, %s132
      %s147 = sphi 0, %s133
      %s151 = sphi 0, %s151
      %s153 = sphi 0, %s151
      %s154 = sphi 0, %s153
      %s168 = sphi 0, %s154
      %s172 = sphi 0, %s172
      %s174 = sphi 0, %s172
      %s175 = sphi 0, %s174
      %s189 = sphi 0, %s175
      %s193 = sphi 0, %s193
      %s195 = sphi 0, %s193
      %s196 = sphi 0, %s195
      %s210 = sphi 0, %s196
      %s214 = sphi 0, %s214
      %s216 = sphi 0, %s214
      %s217 = sphi 0, %s216
      %s231 = sphi 0, %s217
      %s235 = sphi 0, %s235
      %s237 = sphi 0, %s235
      %s238 = sphi 0, %s237
      %s252 = sphi 0, %s238
      %s256 = sphi 0, %s256
      %s258 = sphi 0, %s256
      %s259 = sphi 0, %s258
      %s273 = sphi 0, %s259
      %s279 = sphi 0, %s281
      %s282 = sphi 0, %s279
      %s283 = sphi 0, %s282
      %s299 = sphi 0, %s283
    $region4: #{tpu_custom_call.1} parent=1 // loop_header_branch
      %26 = sbr.rel (%p24) target = $region8
    $region5: #{tpu_custom_call.1} parent=1 // loop_body
      %s28 = ssub.s32 %s23, 1
      %s29 = ssub.s32 %s23, 2
      %s30 = sadd.s32 %s23, 1
      %s31 = ssub.s32 %s23, %s30
      %p32 = scmp.eq.s32.totalorder %s31, 0
      %s34 = sadd.s32 %s33, 1
      %s35 = scalar_select %p32, %s33, %s34
      %p38 = pneg %p32
      %p39 = scmp.eq.s32.totalorder %s23, 1
      %p40 = por %p38, %p39
      %p41 = scmp.ne.s32.totalorder %s33, %s36
      %p42 = scmp.eq.s32.totalorder %s23, 0
      %p43 = por %p41, %p42
      %p44 = scmp.ne.s32.totalorder %s33, %s36
      %p45 = scmp.eq.s32.totalorder %s28, 1
      %p46 = por %p44, %p45
      %p47 = scmp.ne.s32.totalorder %s36, %s37
      %p48 = scmp.eq.s32.totalorder %s28, 0
      %p49 = por %p47, %p48
      %p50 = scmp.ne.s32.totalorder %s36, %s37
      %p51 = scmp.eq.s32.totalorder %s29, 1
      %p52 = por %p50, %p51
      %p54 = scmp.ne.s32.totalorder %s37, %s53
      %p55 = scmp.eq.s32.totalorder %s29, 0
      %p56 = por %p54, %p55
      %s57 = ssub.s32 %s23, %s30
      %p58 = scmp.eq.s32.totalorder %s57, 0
      %s60 = sadd.s32 %s59, 1
      %s61 = scalar_select %p58, %s59, %s60
      %p64 = pneg %p58
      %p65 = scmp.eq.s32.totalorder %s23, 1
      %p66 = por %p64, %p65
      %p67 = scmp.ne.s32.totalorder %s59, %s62
      %p68 = scmp.eq.s32.totalorder %s23, 0
      %p69 = por %p67, %p68
      %p70 = scmp.ne.s32.totalorder %s59, %s62
      %p71 = scmp.eq.s32.totalorder %s28, 1
      %p72 = por %p70, %p71
      %p73 = scmp.ne.s32.totalorder %s62, %s63
      %p74 = scmp.eq.s32.totalorder %s28, 0
      %p75 = por %p73, %p74
      %p76 = scmp.ne.s32.totalorder %s62, %s63
      %p77 = scmp.eq.s32.totalorder %s29, 1
      %p78 = por %p76, %p77
      %p80 = scmp.ne.s32.totalorder %s63, %s79
      %p81 = scmp.eq.s32.totalorder %s29, 0
      %p82 = por %p80, %p81
      %s83 = ssub.s32 %s23, %s30
      %p84 = scmp.eq.s32.totalorder %s83, 0
      %s86 = sadd.s32 %s85, 1
      %s87 = scalar_select %p84, %s85, %s86
      %p90 = pneg %p84
      %p91 = scmp.eq.s32.totalorder %s23, 1
      %p92 = por %p90, %p91
      %p93 = scmp.ne.s32.totalorder %s85, %s88
      %p94 = scmp.eq.s32.totalorder %s23, 0
      %p95 = por %p93, %p94
      %p96 = scmp.ne.s32.totalorder %s85, %s88
      %p97 = scmp.eq.s32.totalorder %s28, 1
      %p98 = por %p96, %p97
      %p99 = scmp.ne.s32.totalorder %s88, %s89
      %p100 = scmp.eq.s32.totalorder %s28, 0
      %p101 = por %p99, %p100
      %p102 = scmp.ne.s32.totalorder %s88, %s89
      %p103 = scmp.eq.s32.totalorder %s29, 1
      %p104 = por %p102, %p103
      %p106 = scmp.ne.s32.totalorder %s89, %s105
      %p107 = scmp.eq.s32.totalorder %s29, 0
      %p108 = por %p106, %p107
      %s110 = sadd.s32 %s109, 1
      %p113 = scmp.eq.s32.totalorder %s23, 1
      %p114 = scmp.ne.s32.totalorder %s109, %s111
      %p115 = scmp.eq.s32.totalorder %s23, 0
      %p116 = por %p114, %p115
      %p117 = scmp.ne.s32.totalorder %s109, %s111
      %p118 = scmp.eq.s32.totalorder %s28, 1
      %p119 = por %p117, %p118
      %p120 = scmp.ne.s32.totalorder %s111, %s112
      %p121 = scmp.eq.s32.totalorder %s28, 0
      %p122 = por %p120, %p121
      %p123 = scmp.ne.s32.totalorder %s111, %s112
      %p124 = scmp.eq.s32.totalorder %s29, 1
      %p125 = por %p123, %p124
      %p127 = scmp.ne.s32.totalorder %s112, %s126
      %p128 = scmp.eq.s32.totalorder %s29, 0
      %p129 = por %p127, %p128
      %s131 = sadd.s32 %s130, 1
      %p134 = scmp.eq.s32.totalorder %s23, 1
      %p135 = scmp.ne.s32.totalorder %s130, %s132
      %p136 = scmp.eq.s32.totalorder %s23, 0
      %p137 = por %p135, %p136
      %p138 = scmp.ne.s32.totalorder %s130, %s132
      %p139 = scmp.eq.s32.totalorder %s28, 1
      %p140 = por %p138, %p139
      %p141 = scmp.ne.s32.totalorder %s132, %s133
      %p142 = scmp.eq.s32.totalorder %s28, 0
      %p143 = por %p141, %p142
      %p144 = scmp.ne.s32.totalorder %s132, %s133
      %p145 = scmp.eq.s32.totalorder %s29, 1
      %p146 = por %p144, %p145
      %p148 = scmp.ne.s32.totalorder %s133, %s147
      %p149 = scmp.eq.s32.totalorder %s29, 0
      %p150 = por %p148, %p149
      %s152 = sadd.s32 %s151, 1
      %p155 = scmp.eq.s32.totalorder %s23, 1
      %p156 = scmp.ne.s32.totalorder %s151, %s153
      %p157 = scmp.eq.s32.totalorder %s23, 0
      %p158 = por %p156, %p157
      %p159 = scmp.ne.s32.totalorder %s151, %s153
      %p160 = scmp.eq.s32.totalorder %s28, 1
      %p161 = por %p159, %p160
      %p162 = scmp.ne.s32.totalorder %s153, %s154
      %p163 = scmp.eq.s32.totalorder %s28, 0
      %p164 = por %p162, %p163
      %p165 = scmp.ne.s32.totalorder %s153, %s154
      %p166 = scmp.eq.s32.totalorder %s29, 1
      %p167 = por %p165, %p166
      %p169 = scmp.ne.s32.totalorder %s154, %s168
      %p170 = scmp.eq.s32.totalorder %s29, 0
      %p171 = por %p169, %p170
      %s173 = sadd.s32 %s172, 1
      %p176 = scmp.eq.s32.totalorder %s23, 1
      %p177 = scmp.ne.s32.totalorder %s172, %s174
      %p178 = scmp.eq.s32.totalorder %s23, 0
      %p179 = por %p177, %p178
      %p180 = scmp.ne.s32.totalorder %s172, %s174
      %p181 = scmp.eq.s32.totalorder %s28, 1
      %p182 = por %p180, %p181
      %p183 = scmp.ne.s32.totalorder %s174, %s175
      %p184 = scmp.eq.s32.totalorder %s28, 0
      %p185 = por %p183, %p184
      %p186 = scmp.ne.s32.totalorder %s174, %s175
      %p187 = scmp.eq.s32.totalorder %s29, 1
      %p188 = por %p186, %p187
      %p190 = scmp.ne.s32.totalorder %s175, %s189
      %p191 = scmp.eq.s32.totalorder %s29, 0
      %p192 = por %p190, %p191
      %s194 = sadd.s32 %s193, 1
      %p197 = scmp.eq.s32.totalorder %s23, 1
      %p198 = scmp.ne.s32.totalorder %s193, %s195
      %p199 = scmp.eq.s32.totalorder %s23, 0
      %p200 = por %p198, %p199
      %p201 = scmp.ne.s32.totalorder %s193, %s195
      %p202 = scmp.eq.s32.totalorder %s28, 1
      %p203 = por %p201, %p202
      %p204 = scmp.ne.s32.totalorder %s195, %s196
      %p205 = scmp.eq.s32.totalorder %s28, 0
      %p206 = por %p204, %p205
      %p207 = scmp.ne.s32.totalorder %s195, %s196
      %p208 = scmp.eq.s32.totalorder %s29, 1
      %p209 = por %p207, %p208
      %p211 = scmp.ne.s32.totalorder %s196, %s210
      %p212 = scmp.eq.s32.totalorder %s29, 0
      %p213 = por %p211, %p212
      %s215 = sadd.s32 %s214, 1
      %p218 = scmp.eq.s32.totalorder %s23, 1
      %p219 = scmp.ne.s32.totalorder %s214, %s216
      %p220 = scmp.eq.s32.totalorder %s23, 0
      %p221 = por %p219, %p220
      %p222 = scmp.ne.s32.totalorder %s214, %s216
      %p223 = scmp.eq.s32.totalorder %s28, 1
      %p224 = por %p222, %p223
      %p225 = scmp.ne.s32.totalorder %s216, %s217
      %p226 = scmp.eq.s32.totalorder %s28, 0
      %p227 = por %p225, %p226
      %p228 = scmp.ne.s32.totalorder %s216, %s217
      %p229 = scmp.eq.s32.totalorder %s29, 1
      %p230 = por %p228, %p229
      %p232 = scmp.ne.s32.totalorder %s217, %s231
      %p233 = scmp.eq.s32.totalorder %s29, 0
      %p234 = por %p232, %p233
      %s236 = sadd.s32 %s235, 1
      %p239 = scmp.eq.s32.totalorder %s23, 1
      %p240 = scmp.ne.s32.totalorder %s235, %s237
      %p241 = scmp.eq.s32.totalorder %s23, 0
      %p242 = por %p240, %p241
      %p243 = scmp.ne.s32.totalorder %s235, %s237
      %p244 = scmp.eq.s32.totalorder %s28, 1
      %p245 = por %p243, %p244
      %p246 = scmp.ne.s32.totalorder %s237, %s238
      %p247 = scmp.eq.s32.totalorder %s28, 0
      %p248 = por %p246, %p247
      %p249 = scmp.ne.s32.totalorder %s237, %s238
      %p250 = scmp.eq.s32.totalorder %s29, 1
      %p251 = por %p249, %p250
      %p253 = scmp.ne.s32.totalorder %s238, %s252
      %p254 = scmp.eq.s32.totalorder %s29, 0
      %p255 = por %p253, %p254
      %s257 = sadd.s32 %s256, 1
      %p260 = scmp.eq.s32.totalorder %s23, 1
      %p261 = scmp.ne.s32.totalorder %s256, %s258
      %p262 = scmp.eq.s32.totalorder %s23, 0
      %p263 = por %p261, %p262
      %p264 = scmp.ne.s32.totalorder %s256, %s258
      %p265 = scmp.eq.s32.totalorder %s28, 1
      %p266 = por %p264, %p265
      %p267 = scmp.ne.s32.totalorder %s258, %s259
      %p268 = scmp.eq.s32.totalorder %s28, 0
      %p269 = por %p267, %p268
      %p270 = scmp.ne.s32.totalorder %s258, %s259
      %p271 = scmp.eq.s32.totalorder %s29, 1
      %p272 = por %p270, %p271
      %p274 = scmp.ne.s32.totalorder %s259, %s273
      %p275 = scmp.eq.s32.totalorder %s29, 0
      %p276 = por %p274, %p275
      %s277 = ssub.s32 %s23, %s30
      %p278 = scmp.eq.s32.totalorder %s277, 0
      %s280 = sadd.s32 %s279, 1
      %s281 = scalar_select %p278, %s279, %s280
      %p284 = pneg %p278
      %p285 = scmp.eq.s32.totalorder %s23, 1
      %p286 = por %p284, %p285
      %p287 = scmp.ne.s32.totalorder %s279, %s282
      %p288 = scmp.eq.s32.totalorder %s23, 0
      %p289 = por %p287, %p288
      %p290 = scmp.ne.s32.totalorder %s279, %s282
      %p291 = scmp.eq.s32.totalorder %s28, 1
      %p292 = por %p290, %p291
      %p293 = scmp.ne.s32.totalorder %s282, %s283
      %p294 = scmp.eq.s32.totalorder %s28, 0
      %p295 = por %p293, %p294
      %p296 = scmp.ne.s32.totalorder %s282, %s283
      %p297 = scmp.eq.s32.totalorder %s29, 1
      %p298 = por %p296, %p297
      %p300 = scmp.ne.s32.totalorder %s283, %s299
      %p301 = scmp.eq.s32.totalorder %s29, 0
      %p302 = por %p300, %p301
      %p303 = scmp.le.s32.totalorder 1, %s23
      %p304 = scmp.lt.s32.totalorder %s23, 3
      %p305 = pnand %p303, %p304
      %p306 = pneg %p305
      // Predicated region
      $region9: #{tpu_custom_call.1} parent=5 // pred_check
        _
      $region10: #{tpu_custom_call.1} parent=5 // pred_check_branch
        %308 = sbr.rel (%p305) target = $region12
      $region11: #{tpu_custom_call.1} parent=5 // pred_region
        %s309 = ssub.s32 %s23, 1
        // Predicated region
        $region13: #{tpu_custom_call.1} parent=11 // pred_check
          %p310 = pneg %p122
        $region14: #{tpu_custom_call.1} parent=11 // pred_check_branch
          %312 = sbr.rel (%p310) target = $region16
        $region15: #{tpu_custom_call.1} parent=11 // pred_region
          %s314 = ssub.s32 2048, 2048
          %315 = vsyncadd [#allocation3], %s314
          %s316 = sshll.u32 [#allocation2], 4
          %s317 = int_to_ptr.vmem [resolvable:$true] %s316
          %322 = dma.hbm_to_vmem [thread:$0]  %s3, 2048, %s317, [#allocation3], 128, 128, 8
        $region16: #{tpu_custom_call.1} parent=11 // pred_fallthru
          _
        // Predicated region
        $region17: #{tpu_custom_call.1} parent=11 // pred_check
          %p323 = pneg %p143
        $region18: #{tpu_custom_call.1} parent=11 // pred_check_branch
          %325 = sbr.rel (%p323) target = $region20
        $region19: #{tpu_custom_call.1} parent=11 // pred_region
          _
        $region20: #{tpu_custom_call.1} parent=11 // pred_fallthru
          _
        // Predicated region
        $region21: #{tpu_custom_call.1} parent=11 // pred_check
          %p326 = pneg %p164
        $region22: #{tpu_custom_call.1} parent=11 // pred_check_branch
          %328 = sbr.rel (%p326) target = $region24
        $region23: #{tpu_custom_call.1} parent=11 // pred_region
          %s330 = ssub.s32 2048, 2048
          %331 = vsyncadd [#allocation6], %s330
          %s332 = sshll.u32 [#allocation5], 4
          %s333 = int_to_ptr.vmem [resolvable:$true] %s332
          %338 = dma.hbm_to_vmem [thread:$0]  %s5, 2048, %s333, [#allocation6], 128, 128, 8
        $region24: #{tpu_custom_call.1} parent=11 // pred_fallthru
          _
        // Predicated region
        $region25: #{tpu_custom_call.1} parent=11 // pred_check
          %p339 = pneg %p185
        $region26: #{tpu_custom_call.1} parent=11 // pred_check_branch
          %341 = sbr.rel (%p339) target = $region28
        $region27: #{tpu_custom_call.1} parent=11 // pred_region
          _
        $region28: #{tpu_custom_call.1} parent=11 // pred_fallthru
          _
        // Predicated region
        $region29: #{tpu_custom_call.1} parent=11 // pred_check
          %p342 = pneg %p206
        $region30: #{tpu_custom_call.1} parent=11 // pred_check_branch
          %344 = sbr.rel (%p342) target = $region32
        $region31: #{tpu_custom_call.1} parent=11 // pred_region
          %s346 = ssub.s32 2048, 2048
          %347 = vsyncadd [#allocation6], %s346
          %s348 = sshll.u32 [#allocation7], 4
          %s349 = int_to_ptr.vmem [resolvable:$true] %s348
          %354 = dma.hbm_to_vmem [thread:$0]  %s7, 2048, %s349, [#allocation6], 128, 128, 8
        $region32: #{tpu_custom_call.1} parent=11 // pred_fallthru
          _
        // Predicated region
        $region33: #{tpu_custom_call.1} parent=11 // pred_check
          %p355 = pneg %p227
        $region34: #{tpu_custom_call.1} parent=11 // pred_check_branch
          %357 = sbr.rel (%p355) target = $region36
        $region35: #{tpu_custom_call.1} parent=11 // pred_region
          _
        $region36: #{tpu_custom_call.1} parent=11 // pred_fallthru
          _
        // Predicated region
        $region37: #{tpu_custom_call.1} parent=11 // pred_check
          %p358 = pneg %p248
        $region38: #{tpu_custom_call.1} parent=11 // pred_check_branch
          %360 = sbr.rel (%p358) target = $region40
        $region39: #{tpu_custom_call.1} parent=11 // pred_region
          %s362 = ssub.s32 2048, 2048
          %363 = vsyncadd [#allocation9], %s362
          %s364 = sshll.u32 [#allocation8], 4
          %s365 = int_to_ptr.vmem [resolvable:$true] %s364
          %370 = dma.hbm_to_vmem [thread:$0]  %s9, 2048, %s365, [#allocation9], 128, 128, 8
        $region40: #{tpu_custom_call.1} parent=11 // pred_fallthru
          _
        // Predicated region
        $region41: #{tpu_custom_call.1} parent=11 // pred_check
          %p371 = pneg %p269
        $region42: #{tpu_custom_call.1} parent=11 // pred_check_branch
          %373 = sbr.rel (%p371) target = $region44
        $region43: #{tpu_custom_call.1} parent=11 // pred_region
          _
        $region44: #{tpu_custom_call.1} parent=11 // pred_fallthru
          _
      $region12: #{tpu_custom_call.1} parent=5 // pred_fallthru
        _
      %p374 = scmp.lt.s32.totalorder %s23, 2
      // Predicated region
      $region45: #{tpu_custom_call.1} parent=5 // pred_check
        %p375 = pneg %p374
      $region46: #{tpu_custom_call.1} parent=5 // pred_check_branch
        %377 = sbr.rel (%p375) target = $region48
      $region47: #{tpu_custom_call.1} parent=5 // pred_region
        // Predicated region
        $region49: #{tpu_custom_call.1} parent=47 // pred_check
          %p378 = pneg %p43
        $region50: #{tpu_custom_call.1} parent=47 // pred_check_branch
          %380 = sbr.rel (%p378) target = $region52
        $region51: #{tpu_custom_call.1} parent=47 // pred_region
          %p381 = scmp.lt.s32.totalorder %s23, 1
          %s382 = scalar_select %p381, %s23, 1
          %s383 = smul.addr %s382, 2
          %s384 = smul.addr %s383, 8
          %s385 = scalar_lea.vmem %s0, %s384
        $region52: #{tpu_custom_call.1} parent=47 // pred_fallthru
          _
        // Predicated region
        $region53: #{tpu_custom_call.1} parent=47 // pred_check
          %p386 = pneg %p69
        $region54: #{tpu_custom_call.1} parent=47 // pred_check_branch
          %388 = sbr.rel (%p386) target = $region56
        $region55: #{tpu_custom_call.1} parent=47 // pred_region
          %p389 = scmp.lt.s32.totalorder %s23, 1
          %s390 = scalar_select %p389, %s23, 1
          %s391 = scalar_lea.vmem %s1, %s390
        $region56: #{tpu_custom_call.1} parent=47 // pred_fallthru
          _
        // Predicated region
        $region57: #{tpu_custom_call.1} parent=47 // pred_check
          %p392 = pneg %p95
        $region58: #{tpu_custom_call.1} parent=47 // pred_check_branch
          %394 = sbr.rel (%p392) target = $region60
        $region59: #{tpu_custom_call.1} parent=47 // pred_region
          %p395 = scmp.lt.s32.totalorder %s23, 1
          %s396 = scalar_select %p395, %s23, 1
          %s397 = smul.addr %s396, 2
          %s398 = smul.addr %s397, 8
          %s399 = scalar_lea.vmem %s2, %s398
        $region60: #{tpu_custom_call.1} parent=47 // pred_fallthru
          _
      $region48: #{tpu_custom_call.1} parent=5 // pred_fallthru
        _
      %p400 = scmp.le.s32.totalorder 1, %s23
      %p401 = scmp.lt.s32.totalorder %s23, 3
      %p402 = pnand %p400, %p401
      %p403 = pneg %p402
      // Predicated region
      $region61: #{tpu_custom_call.1} parent=5 // pred_check
        _
      $region62: #{tpu_custom_call.1} parent=5 // pred_check_branch
        %405 = sbr.rel (%p402) target = $region64
      $region63: #{tpu_custom_call.1} parent=5 // pred_region
        %s406 = ssub.s32 %s23, 1
        // Predicated region
        $region65: #{tpu_custom_call.1} parent=63 // pred_check
          %p407 = pneg %p122
        $region66: #{tpu_custom_call.1} parent=63 // pred_check_branch
          %409 = sbr.rel (%p407) target = $region68
        $region67: #{tpu_custom_call.1} parent=63 // pred_region
          %410 = dma.done [#allocation3], 2048
        $region68: #{tpu_custom_call.1} parent=63 // pred_fallthru
          _
        // Predicated region
        $region69: #{tpu_custom_call.1} parent=63 // pred_check
          %p411 = pneg %p164
        $region70: #{tpu_custom_call.1} parent=63 // pred_check_branch
          %413 = sbr.rel (%p411) target = $region72
        $region71: #{tpu_custom_call.1} parent=63 // pred_region
          %414 = dma.done [#allocation6], 2048
        $region72: #{tpu_custom_call.1} parent=63 // pred_fallthru
          _
        // Predicated region
        $region73: #{tpu_custom_call.1} parent=63 // pred_check
          %p415 = pneg %p206
        $region74: #{tpu_custom_call.1} parent=63 // pred_check_branch
          %417 = sbr.rel (%p415) target = $region76
        $region75: #{tpu_custom_call.1} parent=63 // pred_region
          %418 = dma.done [#allocation6], 2048
        $region76: #{tpu_custom_call.1} parent=63 // pred_fallthru
          _
        // Predicated region
        $region77: #{tpu_custom_call.1} parent=63 // pred_check
          %p419 = pneg %p248
        $region78: #{tpu_custom_call.1} parent=63 // pred_check_branch
          %421 = sbr.rel (%p419) target = $region80
        $region79: #{tpu_custom_call.1} parent=63 // pred_region
          %422 = dma.done [#allocation9], 2048
        $region80: #{tpu_custom_call.1} parent=63 // pred_fallthru
          _
        %p423 = scmp.lt.s32.totalorder %s28, 1
        %s424 = scalar_select %p423, %s28, 1
        %s425 = smul.addr %s424, 2
        %s426 = smul.addr %s425, 8
        %s427 = scalar_lea.vmem %s0, %s426
        %p428 = pneg %p49
        %p429 = pneg %p46
        %p430 = scmp.lt.s32.totalorder %s28, 1
        %s431 = scalar_select %p430, %s28, 1
        %s432 = scalar_lea.vmem %s1, %s431
        %p433 = pneg %p75
        %p434 = pneg %p72
        %p435 = scmp.lt.s32.totalorder %s28, 1
        %s436 = scalar_select %p435, %s28, 1
        %s437 = smul.addr %s436, 2
        %s438 = smul.addr %s437, 8
        %s439 = scalar_lea.vmem %s2, %s438
        %p440 = pneg %p101
        %p441 = pneg %p98
        %p442 = pneg %p122
        %p443 = pneg %p119
        %p444 = pneg %p143
        %p445 = pneg %p140
        %p446 = pneg %p164
        %p447 = pneg %p161
        %p448 = pneg %p185
        %p449 = pneg %p182
        %p450 = pneg %p206
        %p451 = pneg %p203
        %p452 = pneg %p227
        %p453 = pneg %p224
        %p454 = pneg %p248
        %p455 = pneg %p245
        %p456 = pneg %p269
        %p457 = pneg %p266
        %p458 = pneg %p295
        %p459 = pneg %p292
        %s460 = sand.u32 %s282, 1
        %s461 = scalar_lea.sflag [#allocation4], %s460
        %s462 = sand.u32 %s282, 1
        %s463 = smul.addr %s462, 16
        %s464 = scalar_lea.vmem [#allocation10], %s463
        %p465 = scmp.lt.s32.totalorder %s28, 1
        %s466 = scalar_select %p465, %s28, 1
        %s467 = smul.addr %s466, 2
        %s468 = smul.addr %s467, 8
        %s469 = scalar_lea.vmem %s0, %s468
        %p470 = scmp.lt.s32.totalorder %s28, 1
        %s471 = scalar_select %p470, %s28, 1
        %s472 = scalar_lea.vmem %s1, %s471
        %p473 = scmp.lt.s32.totalorder %s28, 1
        %s474 = scalar_select %p473, %s28, 1
        %s475 = smul.addr %s474, 2
        %s476 = smul.addr %s475, 8
        %s477 = scalar_lea.vmem %s2, %s476
        %v478 = vld [vmem:[%s469] sm:$0xff]
        %v479 = vld [vmem:[%s469 + $0x8] sm:$0xff]
        %v480 = vld [vmem:[#allocation2] sm:$0xff]
        %v481 = vld [vmem:[#allocation2 + $0x8] sm:$0xff]
        %v482 = vld [vmem:[#allocation2 + $0x10] sm:$0xff]
        %v483 = vld [vmem:[#allocation2 + $0x18] sm:$0xff]
        %v484 = vld [vmem:[#allocation2 + $0x20] sm:$0xff]
        %v485 = vld [vmem:[#allocation2 + $0x28] sm:$0xff]
        %v486 = vld [vmem:[#allocation2 + $0x30] sm:$0xff]
        %v487 = vld [vmem:[#allocation2 + $0x38] sm:$0xff]
        %v488 = vld [vmem:[#allocation2 + $0x40] sm:$0xff]
        %v489 = vld [vmem:[#allocation2 + $0x48] sm:$0xff]
        %v490 = vld [vmem:[#allocation2 + $0x50] sm:$0xff]
        %v491 = vld [vmem:[#allocation2 + $0x58] sm:$0xff]
        %v492 = vld [vmem:[#allocation2 + $0x60] sm:$0xff]
        %v493 = vld [vmem:[#allocation2 + $0x68] sm:$0xff]
        %v494 = vld [vmem:[#allocation2 + $0x70] sm:$0xff]
        %v495 = vld [vmem:[#allocation2 + $0x78] sm:$0xff]
        %v496 = vld [vmem:[%s4] sm:$0x1]
        %v498 = vlaneseq
        %v499 = vshrl.u32 %v498, 7
        %v500 = vsub.s32 0, %v499
        %v501 = vrot.slane %v496, %v500
        %503 = vmatprep.subr.mxu0 0.0
        %504 = vmatpush1.msra.mxu0 %v480
        %505 = vmatprep.subr.mxu0 0.0
        %506 = vmatpush1.msra.mxu0 %v481
        %507 = vmatprep.subr.mxu0 0.0
        %508 = vmatpush1.msra.mxu0 %v482
        %509 = vmatprep.subr.mxu0 0.0
        %510 = vmatpush1.msra.mxu0 %v483
        %511 = vmatprep.subr.mxu0 0.0
        %512 = vmatpush1.msra.mxu0 %v484
        %513 = vmatprep.subr.mxu0 0.0
        %514 = vmatpush1.msra.mxu0 %v485
        %515 = vmatprep.subr.mxu0 0.0
        %516 = vmatpush1.msra.mxu0 %v486
        %517 = vmatprep.subr.mxu0 0.0
        %518 = vmatpush1.msra.mxu0 %v487
        %519 = vmatprep.subr.mxu0 0.0
        %520 = vmatpush1.msra.mxu0 %v488
        %521 = vmatprep.subr.mxu0 0.0
        %522 = vmatpush1.msra.mxu0 %v489
        %523 = vmatprep.subr.mxu0 0.0
        %524 = vmatpush1.msra.mxu0 %v490
        %525 = vmatprep.subr.mxu0 0.0
        %526 = vmatpush1.msra.mxu0 %v491
        %527 = vmatprep.subr.mxu0 0.0
        %528 = vmatpush1.msra.mxu0 %v492
        %529 = vmatprep.subr.mxu0 0.0
        %530 = vmatpush1.msra.mxu0 %v493
        %531 = vmatprep.subr.mxu0 0.0
        %532 = vmatpush1.msra.mxu0 %v494
        %533 = vmatprep.subr.mxu0 0.0
        %534 = vmatpush1.msra.mxu0 %v495
        %535 = vmatprep.subr.mxu0 0.0
        %536 = vmatpush1.msra.mxu0 0.0
        %537 = vmatprep.subr.mxu0 0.0
        %538 = vmatpush1.msra.mxu0 0.0
        %539 = vmatprep.subr.mxu0 0.0
        %540 = vmatpush1.msra.mxu0 0.0
        %541 = vmatprep.subr.mxu0 0.0
        %542 = vmatpush1.msra.mxu0 0.0
        %543 = vmatprep.subr.mxu0 0.0
        %544 = vmatpush1.msra.mxu0 0.0
        %545 = vmatprep.subr.mxu0 0.0
        %546 = vmatpush1.msra.mxu0 0.0
        %547 = vmatprep.subr.mxu0 0.0
        %548 = vmatpush1.msra.mxu0 0.0
        %549 = vmatprep.subr.mxu0 0.0
        %550 = vmatpush1.msra.mxu0 0.0
        %551 = vmatprep.subr.mxu0 0.0
        %552 = vmatpush1.msra.mxu0 0.0
        %553 = vmatprep.subr.mxu0 0.0
        %554 = vmatpush1.msra.mxu0 0.0
        %555 = vmatprep.subr.mxu0 0.0
        %556 = vmatpush1.msra.mxu0 0.0
        %557 = vmatprep.subr.mxu0 0.0
        %558 = vmatpush1.msra.mxu0 0.0
        %559 = vmatprep.subr.mxu0 0.0
        %560 = vmatpush1.msra.mxu0 0.0
        %561 = vmatprep.subr.mxu0 0.0
        %562 = vmatpush1.msra.mxu0 0.0
        %563 = vmatprep.subr.mxu0 0.0
        %564 = vmatpush1.msra.mxu0 0.0
        %565 = vmatprep.subr.mxu0 0.0
        %566 = vmatpush1.msra.mxu0 0.0
        %567 = vmatprep.mubr.f32.mxu0 0.0
        %568 = vmatmul.mubr.f32.gmra.mrb[0].mxu0 %v478
        %v569 = vpop.f32.mrb[0].mxu0
        %v570 = vadd.f32 %v501, %v569
        %v571 = vpop.f32.mrb[0].mxu0
        %572 = vmatprep.mubr.f32.mxu0 0.0
        %573 = vmatmul.mubr.f32.gmra.mrb[0].mxu0 %v479
        %v574 = vpop.f32.mrb[0].mxu0
        %v575 = vadd.f32 %v501, %v574
        %v576 = vpop.f32.mrb[0].mxu0
        %577 = vdwg.mxu0
        %v578 = vld [vmem:[#allocation5] sm:$0xff]
        %v579 = vld [vmem:[#allocation5 + $0x8] sm:$0xff]
        %v580 = vld [vmem:[#allocation5 + $0x10] sm:$0xff]
        %v581 = vld [vmem:[#allocation5 + $0x18] sm:$0xff]
        %v582 = vld [vmem:[#allocation5 + $0x20] sm:$0xff]
        %v583 = vld [vmem:[#allocation5 + $0x28] sm:$0xff]
        %v584 = vld [vmem:[#allocation5 + $0x30] sm:$0xff]
        %v585 = vld [vmem:[#allocation5 + $0x38] sm:$0xff]
        %v586 = vld [vmem:[#allocation5 + $0x40] sm:$0xff]
        %v587 = vld [vmem:[#allocation5 + $0x48] sm:$0xff]
        %v588 = vld [vmem:[#allocation5 + $0x50] sm:$0xff]
        %v589 = vld [vmem:[#allocation5 + $0x58] sm:$0xff]
        %v590 = vld [vmem:[#allocation5 + $0x60] sm:$0xff]
        %v591 = vld [vmem:[#allocation5 + $0x68] sm:$0xff]
        %v592 = vld [vmem:[#allocation5 + $0x70] sm:$0xff]
        %v593 = vld [vmem:[#allocation5 + $0x78] sm:$0xff]
        %v594 = vld [vmem:[%s6] sm:$0x1]
        %v596 = vlaneseq
        %v597 = vshrl.u32 %v596, 7
        %v598 = vsub.s32 0, %v597
        %v599 = vrot.slane %v594, %v598
        %601 = vmatprep.subr.mxu0 0.0
        %602 = vmatpush1.msra.mxu0 %v578
        %603 = vmatprep.subr.mxu0 0.0
        %604 = vmatpush1.msra.mxu0 %v579
        %605 = vmatprep.subr.mxu0 0.0
        %606 = vmatpush1.msra.mxu0 %v580
        %607 = vmatprep.subr.mxu0 0.0
        %608 = vmatpush1.msra.mxu0 %v581
        %609 = vmatprep.subr.mxu0 0.0
        %610 = vmatpush1.msra.mxu0 %v582
        %611 = vmatprep.subr.mxu0 0.0
        %612 = vmatpush1.msra.mxu0 %v583
        %613 = vmatprep.subr.mxu0 0.0
        %614 = vmatpush1.msra.mxu0 %v584
        %615 = vmatprep.subr.mxu0 0.0
        %616 = vmatpush1.msra.mxu0 %v585
        %617 = vmatprep.subr.mxu0 0.0
        %618 = vmatpush1.msra.mxu0 %v586
        %619 = vmatprep.subr.mxu0 0.0
        %620 = vmatpush1.msra.mxu0 %v587
        %621 = vmatprep.subr.mxu0 0.0
        %622 = vmatpush1.msra.mxu0 %v588
        %623 = vmatprep.subr.mxu0 0.0
        %624 = vmatpush1.msra.mxu0 %v589
        %625 = vmatprep.subr.mxu0 0.0
        %626 = vmatpush1.msra.mxu0 %v590
        %627 = vmatprep.subr.mxu0 0.0
        %628 = vmatpush1.msra.mxu0 %v591
        %629 = vmatprep.subr.mxu0 0.0
        %630 = vmatpush1.msra.mxu0 %v592
        %631 = vmatprep.subr.mxu0 0.0
        %632 = vmatpush1.msra.mxu0 %v593
        %633 = vmatprep.subr.mxu0 0.0
        %634 = vmatpush1.msra.mxu0 0.0
        %635 = vmatprep.subr.mxu0 0.0
        %636 = vmatpush1.msra.mxu0 0.0
        %637 = vmatprep.subr.mxu0 0.0
        %638 = vmatpush1.msra.mxu0 0.0
        %639 = vmatprep.subr.mxu0 0.0
        %640 = vmatpush1.msra.mxu0 0.0
        %641 = vmatprep.subr.mxu0 0.0
        %642 = vmatpush1.msra.mxu0 0.0
        %643 = vmatprep.subr.mxu0 0.0
        %644 = vmatpush1.msra.mxu0 0.0
        %645 = vmatprep.subr.mxu0 0.0
        %646 = vmatpush1.msra.mxu0 0.0
        %647 = vmatprep.subr.mxu0 0.0
        %648 = vmatpush1.msra.mxu0 0.0
        %649 = vmatprep.subr.mxu0 0.0
        %650 = vmatpush1.msra.mxu0 0.0
        %651 = vmatprep.subr.mxu0 0.0
        %652 = vmatpush1.msra.mxu0 0.0
        %653 = vmatprep.subr.mxu0 0.0
        %654 = vmatpush1.msra.mxu0 0.0
        %655 = vmatprep.subr.mxu0 0.0
        %656 = vmatpush1.msra.mxu0 0.0
        %657 = vmatprep.subr.mxu0 0.0
        %658 = vmatpush1.msra.mxu0 0.0
        %659 = vmatprep.subr.mxu0 0.0
        %660 = vmatpush1.msra.mxu0 0.0
        %661 = vmatprep.subr.mxu0 0.0
        %662 = vmatpush1.msra.mxu0 0.0
        %663 = vmatprep.subr.mxu0 0.0
        %664 = vmatpush1.msra.mxu0 0.0
        %665 = vmatprep.mubr.f32.mxu0 0.0
        %666 = vmatmul.mubr.f32.gmra.mrb[0].mxu0 %v478
        %v667 = vpop.f32.mrb[0].mxu0
        %v668 = vadd.f32 %v599, %v667
        %v669 = vpop.f32.mrb[0].mxu0
        %670 = vmatprep.mubr.f32.mxu0 0.0
        %671 = vmatmul.mubr.f32.gmra.mrb[0].mxu0 %v479
        %v672 = vpop.f32.mrb[0].mxu0
        %v673 = vadd.f32 %v599, %v672
        %v674 = vpop.f32.mrb[0].mxu0
        %675 = vdwg.mxu0
        %v676 = vld [vmem:[#allocation7] sm:$0xff]
        %v677 = vld [vmem:[#allocation7 + $0x8] sm:$0xff]
        %v678 = vld [vmem:[#allocation7 + $0x10] sm:$0xff]
        %v679 = vld [vmem:[#allocation7 + $0x18] sm:$0xff]
        %v680 = vld [vmem:[#allocation7 + $0x20] sm:$0xff]
        %v681 = vld [vmem:[#allocation7 + $0x28] sm:$0xff]
        %v682 = vld [vmem:[#allocation7 + $0x30] sm:$0xff]
        %v683 = vld [vmem:[#allocation7 + $0x38] sm:$0xff]
        %v684 = vld [vmem:[#allocation7 + $0x40] sm:$0xff]
        %v685 = vld [vmem:[#allocation7 + $0x48] sm:$0xff]
        %v686 = vld [vmem:[#allocation7 + $0x50] sm:$0xff]
        %v687 = vld [vmem:[#allocation7 + $0x58] sm:$0xff]
        %v688 = vld [vmem:[#allocation7 + $0x60] sm:$0xff]
        %v689 = vld [vmem:[#allocation7 + $0x68] sm:$0xff]
        %v690 = vld [vmem:[#allocation7 + $0x70] sm:$0xff]
        %v691 = vld [vmem:[#allocation7 + $0x78] sm:$0xff]
        %v692 = vld [vmem:[%s8] sm:$0x1]
        %v694 = vlaneseq
        %v695 = vshrl.u32 %v694, 7
        %v696 = vsub.s32 0, %v695
        %v697 = vrot.slane %v692, %v696
        %699 = vmatprep.subr.mxu0 0.0
        %700 = vmatpush1.msra.mxu0 %v676
        %701 = vmatprep.subr.mxu0 0.0
        %702 = vmatpush1.msra.mxu0 %v677
        %703 = vmatprep.subr.mxu0 0.0
        %704 = vmatpush1.msra.mxu0 %v678
        %705 = vmatprep.subr.mxu0 0.0
        %706 = vmatpush1.msra.mxu0 %v679
        %707 = vmatprep.subr.mxu0 0.0
        %708 = vmatpush1.msra.mxu0 %v680
        %709 = vmatprep.subr.mxu0 0.0
        %710 = vmatpush1.msra.mxu0 %v681
        %711 = vmatprep.subr.mxu0 0.0
        %712 = vmatpush1.msra.mxu0 %v682
        %713 = vmatprep.subr.mxu0 0.0
        %714 = vmatpush1.msra.mxu0 %v683
        %715 = vmatprep.subr.mxu0 0.0
        %716 = vmatpush1.msra.mxu0 %v684
        %717 = vmatprep.subr.mxu0 0.0
        %718 = vmatpush1.msra.mxu0 %v685
        %719 = vmatprep.subr.mxu0 0.0
        %720 = vmatpush1.msra.mxu0 %v686
        %721 = vmatprep.subr.mxu0 0.0
        %722 = vmatpush1.msra.mxu0 %v687
        %723 = vmatprep.subr.mxu0 0.0
        %724 = vmatpush1.msra.mxu0 %v688
        %725 = vmatprep.subr.mxu0 0.0
        %726 = vmatpush1.msra.mxu0 %v689
        %727 = vmatprep.subr.mxu0 0.0
        %728 = vmatpush1.msra.mxu0 %v690
        %729 = vmatprep.subr.mxu0 0.0
        %730 = vmatpush1.msra.mxu0 %v691
        %731 = vmatprep.subr.mxu0 0.0
        %732 = vmatpush1.msra.mxu0 0.0
        %733 = vmatprep.subr.mxu0 0.0
        %734 = vmatpush1.msra.mxu0 0.0
        %735 = vmatprep.subr.mxu0 0.0
        %736 = vmatpush1.msra.mxu0 0.0
        %737 = vmatprep.subr.mxu0 0.0
        %738 = vmatpush1.msra.mxu0 0.0
        %739 = vmatprep.subr.mxu0 0.0
        %740 = vmatpush1.msra.mxu0 0.0
        %741 = vmatprep.subr.mxu0 0.0
        %742 = vmatpush1.msra.mxu0 0.0
        %743 = vmatprep.subr.mxu0 0.0
        %744 = vmatpush1.msra.mxu0 0.0
        %745 = vmatprep.subr.mxu0 0.0
        %746 = vmatpush1.msra.mxu0 0.0
        %747 = vmatprep.subr.mxu0 0.0
        %748 = vmatpush1.msra.mxu0 0.0
        %749 = vmatprep.subr.mxu0 0.0
        %750 = vmatpush1.msra.mxu0 0.0
        %751 = vmatprep.subr.mxu0 0.0
        %752 = vmatpush1.msra.mxu0 0.0
        %753 = vmatprep.subr.mxu0 0.0
        %754 = vmatpush1.msra.mxu0 0.0
        %755 = vmatprep.subr.mxu0 0.0
        %756 = vmatpush1.msra.mxu0 0.0
        %757 = vmatprep.subr.mxu0 0.0
        %758 = vmatpush1.msra.mxu0 0.0
        %759 = vmatprep.subr.mxu0 0.0
        %760 = vmatpush1.msra.mxu0 0.0
        %761 = vmatprep.subr.mxu0 0.0
        %762 = vmatpush1.msra.mxu0 0.0
        %763 = vmatprep.mubr.f32.mxu0 0.0
        %764 = vmatmul.mubr.f32.gmra.mrb[0].mxu0 %v478
        %v765 = vpop.f32.mrb[0].mxu0
        %v766 = vadd.f32 %v697, %v765
        %v767 = vpop.f32.mrb[0].mxu0
        %768 = vmatprep.mubr.f32.mxu0 0.0
        %769 = vmatmul.mubr.f32.gmra.mrb[0].mxu0 %v479
        %v770 = vpop.f32.mrb[0].mxu0
        %v771 = vadd.f32 %v697, %v770
        %v772 = vpop.f32.mrb[0].mxu0
        %773 = vdwg.mxu0
        %v774 = vld [vmem:[%s472] sm:$0x1]
        %vm775 = vcmp.gt.f32.partialorder %v774, 0.5
        %v776 = vsel %vm775, 0.0, -1e+30
        %v777 = vld [vmem:[#allocation8] sm:$0xff]
        %v778 = vld [vmem:[#allocation8 + $0x8] sm:$0xff]
        %v779 = vld [vmem:[#allocation8 + $0x10] sm:$0xff]
        %v780 = vld [vmem:[#allocation8 + $0x18] sm:$0xff]
        %v781 = vld [vmem:[#allocation8 + $0x20] sm:$0xff]
        %v782 = vld [vmem:[#allocation8 + $0x28] sm:$0xff]
        %v783 = vld [vmem:[#allocation8 + $0x30] sm:$0xff]
        %v784 = vld [vmem:[#allocation8 + $0x38] sm:$0xff]
        %v785 = vld [vmem:[#allocation8 + $0x40] sm:$0xff]
        %v786 = vld [vmem:[#allocation8 + $0x48] sm:$0xff]
        %v787 = vld [vmem:[#allocation8 + $0x50] sm:$0xff]
        %v788 = vld [vmem:[#allocation8 + $0x58] sm:$0xff]
        %v789 = vld [vmem:[#allocation8 + $0x60] sm:$0xff]
        %v790 = vld [vmem:[#allocation8 + $0x68] sm:$0xff]
        %v791 = vld [vmem:[#allocation8 + $0x70] sm:$0xff]
        %v792 = vld [vmem:[#allocation8 + $0x78] sm:$0xff]
        %vm793 = vcmask 523264
        %v794 = vsel %vm793, %v570, 0.0
        %795 = vadd.xlane.f32.xlu0 %v794
        %v796 = vpop.xlane.xlu0 %795
        %v797 = vsel %vm793, %v575, 0.0
        %798 = vadd.xlane.f32.xlu0 %v797
        %v799 = vpop.xlane.xlu0 %798
        %v800 = vrcp.pop 64.0
        %v801 = vmul.f32 %v796, %v800
        %v802 = vmul.f32 %v799, %v800
        %v803 = vsub.f32 %v570, %v801
        %v804 = vsub.f32 %v575, %v802
        %v805 = vmul.f32 %v803, %v803
        %v806 = vmul.f32 %v804, %v804
        %v807 = vsel %vm793, %v805, 0.0
        %808 = vadd.xlane.f32.xlu0 %v807
        %v809 = vpop.xlane.xlu0 %808
        %v810 = vsel %vm793, %v806, 0.0
        %811 = vadd.xlane.f32.xlu0 %v810
        %v812 = vpop.xlane.xlu0 %811
        %v813 = vmul.f32 %v809, %v800
        %v814 = vmul.f32 %v812, %v800
        %v815 = vadd.f32 %v813, 1e-06
        %v816 = vadd.f32 %v814, 1e-06
        %v817 = vrsqrt.pop %v815
        %v818 = vrsqrt.pop %v816
        %v819 = vmul.f32 %v803, %v817
        %v820 = vmul.f32 %v804, %v818
        %v821 = vsel %vm793, %v668, 0.0
        %822 = vadd.xlane.f32.xlu0 %v821
        %v823 = vpop.xlane.xlu0 %822
        %v824 = vsel %vm793, %v673, 0.0
        %825 = vadd.xlane.f32.xlu0 %v824
        %v826 = vpop.xlane.xlu0 %825
        %v827 = vmul.f32 %v823, %v800
        %v828 = vmul.f32 %v826, %v800
        %v829 = vsub.f32 %v668, %v827
        %v830 = vsub.f32 %v673, %v828
        %v831 = vmul.f32 %v829, %v829
        %v832 = vmul.f32 %v830, %v830
        %v833 = vsel %vm793, %v831, 0.0
        %834 = vadd.xlane.f32.xlu0 %v833
        %v835 = vpop.xlane.xlu0 %834
        %v836 = vsel %vm793, %v832, 0.0
        %837 = vadd.xlane.f32.xlu0 %v836
        %v838 = vpop.xlane.xlu0 %837
        %v839 = vmul.f32 %v835, %v800
        %v840 = vmul.f32 %v838, %v800
        %v841 = vadd.f32 %v839, 1e-06
        %v842 = vadd.f32 %v840, 1e-06
        %v843 = vrsqrt.pop %v841
        %v844 = vrsqrt.pop %v842
        %v845 = vmul.f32 %v829, %v843
        %v846 = vmul.f32 %v830, %v844
        %v848 = vsel %vm793, %v819, 0
        %v851 = vsel %vm793, %v820, 0
        %v854 = vsel %vm793, %v845, 0
        %v857 = vsel %vm793, %v846, 0
        %859 = vmatprep.subr.mxu0 0.0
        %860 = vmatpush1.xpose.msra.mxu0 %v854
        %861 = vmatprep.subr.mxu0 0.0
        %862 = vmatpush1.xpose.msra.mxu0 %v857
        %863 = vmatprep.subr.mxu0 0.0
        %864 = vmatpush1.xpose.msra.mxu0 0.0
        %865 = vmatprep.subr.mxu0 0.0
        %866 = vmatpush1.xpose.msra.mxu0 0.0
        %867 = vmatprep.subr.mxu0 0.0
        %868 = vmatpush1.xpose.msra.mxu0 0.0
        %869 = vmatprep.subr.mxu0 0.0
        %870 = vmatpush1.xpose.msra.mxu0 0.0
        %871 = vmatprep.subr.mxu0 0.0
        %872 = vmatpush1.xpose.msra.mxu0 0.0
        %873 = vmatprep.subr.mxu0 0.0
        %874 = vmatpush1.xpose.msra.mxu0 0.0
        %875 = vmatprep.subr.mxu0 0.0
        %876 = vmatpush1.xpose.msra.mxu0 0.0
        %877 = vmatprep.subr.mxu0 0.0
        %878 = vmatpush1.xpose.msra.mxu0 0.0
        %879 = vmatprep.subr.mxu0 0.0
        %880 = vmatpush1.xpose.msra.mxu0 0.0
        %881 = vmatprep.subr.mxu0 0.0
        %882 = vmatpush1.xpose.msra.mxu0 0.0
        %883 = vmatprep.subr.mxu0 0.0
        %884 = vmatpush1.xpose.msra.mxu0 0.0
        %885 = vmatprep.subr.mxu0 0.0
        %886 = vmatpush1.xpose.msra.mxu0 0.0
        %887 = vmatprep.subr.mxu0 0.0
        %888 = vmatpush1.xpose.msra.mxu0 0.0
        %889 = vmatprep.subr.mxu0 0.0
        %890 = vmatpush1.xpose.msra.mxu0 0.0
        %891 = vmatprep.subr.mxu0 0.0
        %892 = vmatpush1.xpose.msra.mxu0 0.0
        %893 = vmatprep.subr.mxu0 0.0
        %894 = vmatpush1.xpose.msra.mxu0 0.0
        %895 = vmatprep.subr.mxu0 0.0
        %896 = vmatpush1.xpose.msra.mxu0 0.0
        %897 = vmatprep.subr.mxu0 0.0
        %898 = vmatpush1.xpose.msra.mxu0 0.0
        %899 = vmatprep.subr.mxu0 0.0
        %900 = vmatpush1.xpose.msra.mxu0 0.0
        %901 = vmatprep.subr.mxu0 0.0
        %902 = vmatpush1.xpose.msra.mxu0 0.0
        %903 = vmatprep.subr.mxu0 0.0
        %904 = vmatpush1.xpose.msra.mxu0 0.0
        %905 = vmatprep.subr.mxu0 0.0
        %906 = vmatpush1.xpose.msra.mxu0 0.0
        %907 = vmatprep.subr.mxu0 0.0
        %908 = vmatpush1.xpose.msra.mxu0 0.0
        %909 = vmatprep.subr.mxu0 0.0
        %910 = vmatpush1.xpose.msra.mxu0 0.0
        %911 = vmatprep.subr.mxu0 0.0
        %912 = vmatpush1.xpose.msra.mxu0 0.0
        %913 = vmatprep.subr.mxu0 0.0
        %914 = vmatpush1.xpose.msra.mxu0 0.0
        %915 = vmatprep.subr.mxu0 0.0
        %916 = vmatpush1.xpose.msra.mxu0 0.0
        %917 = vmatprep.subr.mxu0 0.0
        %918 = vmatpush1.xpose.msra.mxu0 0.0
        %919 = vmatprep.subr.mxu0 0.0
        %920 = vmatpush1.xpose.msra.mxu0 0.0
        %921 = vmatprep.subr.mxu0 0.0
        %922 = vmatpush1.xpose.msra.mxu0 0.0
        %923 = vmatprep.mubr.f32.mxu0 0.0
        %924 = vmatmul.mubr.f32.gmra.mrb[0].mxu0 %v848
        %v925 = vpop.f32.mrb[0].mxu0
        %v926 = vadd.f32 0.0, %v925
        %v927 = vpop.f32.mrb[0].mxu0
        %928 = vmatprep.mubr.f32.mxu0 0.0
        %929 = vmatmul.mubr.f32.gmra.mrb[0].mxu0 %v851
        %v930 = vpop.f32.mrb[0].mxu0
        %v931 = vadd.f32 0.0, %v930
        %v932 = vpop.f32.mrb[0].mxu0
        %933 = vdwg.mxu0
        %v934 = vmul.f32 %v926, 0.0078125
        %v935 = vmul.f32 %v931, 0.0078125
        %v937 = vlaneseq
        %v938 = vshrl.u32 %v937, 7
        %v939 = vsub.s32 0, %v938
        %v940 = vrot.slane %v776, %v939
        %v942 = vadd.f32 %v934, %v940
        %v943 = vadd.f32 %v935, %v940
        %vm944 = vcmask 130048
        %v945 = vsel %vm944, %v942, -inf
        %946 = vmax.xlane.f32.xlu0 %v945
        %v947 = vpop.xlane.xlu0 %946
        %v948 = vsel %vm944, %v943, -inf
        %949 = vmax.xlane.f32.xlu0 %v948
        %v950 = vpop.xlane.xlu0 %949
        %v951 = vsub.f32 %v942, %v947
        %v952 = vsub.f32 %v943, %v950
        %v953 = vmul.f32 %v951, 1.442695
        %v954 = vpow.pop %v953
        %v955 = vmul.f32 %v952, 1.442695
        %v956 = vpow.pop %v955
        %v957 = vsel %vm944, %v954, 0.0
        %958 = vadd.xlane.f32.xlu0 %v957
        %v959 = vpop.xlane.xlu0 %958
        %v960 = vsel %vm944, %v956, 0.0
        %961 = vadd.xlane.f32.xlu0 %v960
        %v962 = vpop.xlane.xlu0 %961
        %v963 = vrcp.pop %v959
        %v964 = vmul.f32 %v954, %v963
        %v965 = vrcp.pop %v962
        %v966 = vmul.f32 %v956, %v965
        %v968 = vsel %vm944, %v964, 0
        %v971 = vsel %vm944, %v966, 0
        %973 = vmatprep.subr.mxu0 0.0
        %974 = vmatpush1.msra.mxu0 %v766
        %975 = vmatprep.subr.mxu0 0.0
        %976 = vmatpush1.msra.mxu0 %v771
        %977 = vmatprep.subr.mxu0 0.0
        %978 = vmatpush1.msra.mxu0 0.0
        %979 = vmatprep.subr.mxu0 0.0
        %980 = vmatpush1.msra.mxu0 0.0
        %981 = vmatprep.subr.mxu0 0.0
        %982 = vmatpush1.msra.mxu0 0.0
        %983 = vmatprep.subr.mxu0 0.0
        %984 = vmatpush1.msra.mxu0 0.0
        %985 = vmatprep.subr.mxu0 0.0
        %986 = vmatpush1.msra.mxu0 0.0
        %987 = vmatprep.subr.mxu0 0.0
        %988 = vmatpush1.msra.mxu0 0.0
        %989 = vmatprep.subr.mxu0 0.0
        %990 = vmatpush1.msra.mxu0 0.0
        %991 = vmatprep.subr.mxu0 0.0
        %992 = vmatpush1.msra.mxu0 0.0
        %993 = vmatprep.subr.mxu0 0.0
        %994 = vmatpush1.msra.mxu0 0.0
        %995 = vmatprep.subr.mxu0 0.0
        %996 = vmatpush1.msra.mxu0 0.0
        %997 = vmatprep.subr.mxu0 0.0
        %998 = vmatpush1.msra.mxu0 0.0
        %999 = vmatprep.subr.mxu0 0.0
        %1000 = vmatpush1.msra.mxu0 0.0
        %1001 = vmatprep.subr.mxu0 0.0
        %1002 = vmatpush1.msra.mxu0 0.0
        %1003 = vmatprep.subr.mxu0 0.0
        %1004 = vmatpush1.msra.mxu0 0.0
        %1005 = vmatprep.subr.mxu0 0.0
        %1006 = vmatpush1.msra.mxu0 0.0
        %1007 = vmatprep.subr.mxu0 0.0
        %1008 = vmatpush1.msra.mxu0 0.0
        %1009 = vmatprep.subr.mxu0 0.0
        %1010 = vmatpush1.msra.mxu0 0.0
        %1011 = vmatprep.subr.mxu0 0.0
        %1012 = vmatpush1.msra.mxu0 0.0
        %1013 = vmatprep.subr.mxu0 0.0
        %1014 = vmatpush1.msra.mxu0 0.0
        %1015 = vmatprep.subr.mxu0 0.0
        %1016 = vmatpush1.msra.mxu0 0.0
        %1017 = vmatprep.subr.mxu0 0.0
        %1018 = vmatpush1.msra.mxu0 0.0
        %1019 = vmatprep.subr.mxu0 0.0
        %1020 = vmatpush1.msra.mxu0 0.0
        %1021 = vmatprep.subr.mxu0 0.0
        %1022 = vmatpush1.msra.mxu0 0.0
        %1023 = vmatprep.subr.mxu0 0.0
        %1024 = vmatpush1.msra.mxu0 0.0
        %1025 = vmatprep.subr.mxu0 0.0
        %1026 = vmatpush1.msra.mxu0 0.0
        %1027 = vmatprep.subr.mxu0 0.0
        %1028 = vmatpush1.msra.mxu0 0.0
        %1029 = vmatprep.subr.mxu0 0.0
        %1030 = vmatpush1.msra.mxu0 0.0
        %1031 = vmatprep.subr.mxu0 0.0
        %1032 = vmatpush1.msra.mxu0 0.0
        %1033 = vmatprep.subr.mxu0 0.0
        %1034 = vmatpush1.msra.mxu0 0.0
        %1035 = vmatprep.subr.mxu0 0.0
        %1036 = vmatpush1.msra.mxu0 0.0
        %1037 = vmatprep.mubr.f32.mxu0 0.0
        %1038 = vmatmul.mubr.f32.gmra.mrb[0].mxu0 %v968
        %v1039 = vpop.f32.mrb[0].mxu0
        %v1040 = vadd.f32 0.0, %v1039
        %v1041 = vpop.f32.mrb[0].mxu0
        %1042 = vmatprep.mubr.f32.mxu0 0.0
        %1043 = vmatmul.mubr.f32.gmra.mrb[0].mxu0 %v971
        %v1044 = vpop.f32.mrb[0].mxu0
        %v1045 = vadd.f32 0.0, %v1044
        %v1046 = vpop.f32.mrb[0].mxu0
        %1047 = vdwg.mxu0
        %1050 = vrot.lane.b32.xlu0 %v570, 64
        %v1051 = vpop.permute.xlu0 %1050
        %1052 = vrot.lane.b32.xlu0 %v575, 64
        %v1053 = vpop.permute.xlu0 %1052
        %v1056 = vsel %vm793, %v1051, 0.0
        %1057 = vadd.xlane.f32.xlu0 %v1056
        %v1058 = vpop.xlane.xlu0 %1057
        %v1059 = vsel %vm793, %v1053, 0.0
        %1060 = vadd.xlane.f32.xlu0 %v1059
        %v1061 = vpop.xlane.xlu0 %1060
        %v1062 = vmul.f32 %v1058, %v800
        %v1063 = vmul.f32 %v1061, %v800
        %v1064 = vsub.f32 %v570, %v1062
        %v1065 = vsub.f32 %v575, %v1063
        %v1066 = vmul.f32 %v1064, %v1064
        %v1067 = vmul.f32 %v1065, %v1065
        %1070 = vrot.lane.b32.xlu0 %v1066, 64
        %v1071 = vpop.permute.xlu0 %1070
        %1072 = vrot.lane.b32.xlu0 %v1067, 64
        %v1073 = vpop.permute.xlu0 %1072
        %v1076 = vsel %vm793, %v1071, 0.0
        %1077 = vadd.xlane.f32.xlu0 %v1076
        %v1078 = vpop.xlane.xlu0 %1077
        %v1079 = vsel %vm793, %v1073, 0.0
        %1080 = vadd.xlane.f32.xlu0 %v1079
        %v1081 = vpop.xlane.xlu0 %1080
        %v1082 = vmul.f32 %v1078, %v800
        %v1083 = vmul.f32 %v1081, %v800
        %v1084 = vadd.f32 %v1082, 1e-06
        %v1085 = vadd.f32 %v1083, 1e-06
        %v1086 = vrsqrt.pop %v1084
        %v1087 = vrsqrt.pop %v1085
        %v1088 = vmul.f32 %v1064, %v1086
        %v1089 = vmul.f32 %v1065, %v1087
        %1092 = vrot.lane.b32.xlu0 %v668, 64
        %v1093 = vpop.permute.xlu0 %1092
        %1094 = vrot.lane.b32.xlu0 %v673, 64
        %v1095 = vpop.permute.xlu0 %1094
        %v1098 = vsel %vm793, %v1093, 0.0
        %1099 = vadd.xlane.f32.xlu0 %v1098
        %v1100 = vpop.xlane.xlu0 %1099
        %v1101 = vsel %vm793, %v1095, 0.0
        %1102 = vadd.xlane.f32.xlu0 %v1101
        %v1103 = vpop.xlane.xlu0 %1102
        %v1104 = vmul.f32 %v1100, %v800
        %v1105 = vmul.f32 %v1103, %v800
        %v1106 = vsub.f32 %v668, %v1104
        %v1107 = vsub.f32 %v673, %v1105
        %v1108 = vmul.f32 %v1106, %v1106
        %v1109 = vmul.f32 %v1107, %v1107
        %1112 = vrot.lane.b32.xlu0 %v1108, 64
        %v1113 = vpop.permute.xlu0 %1112
        %1114 = vrot.lane.b32.xlu0 %v1109, 64
        %v1115 = vpop.permute.xlu0 %1114
        %v1118 = vsel %vm793, %v1113, 0.0
        %1119 = vadd.xlane.f32.xlu0 %v1118
        %v1120 = vpop.xlane.xlu0 %1119
        %v1121 = vsel %vm793, %v1115, 0.0
        %1122 = vadd.xlane.f32.xlu0 %v1121
        %v1123 = vpop.xlane.xlu0 %1122
        %v1124 = vmul.f32 %v1120, %v800
        %v1125 = vmul.f32 %v1123, %v800
        %v1126 = vadd.f32 %v1124, 1e-06
        %v1127 = vadd.f32 %v1125, 1e-06
        %v1128 = vrsqrt.pop %v1126
        %v1129 = vrsqrt.pop %v1127
        %v1130 = vmul.f32 %v1106, %v1128
        %v1131 = vmul.f32 %v1107, %v1129
        %1134 = vrot.lane.b32.xlu0 %v1088, 64
        %v1135 = vpop.permute.xlu0 %1134
        %1136 = vrot.lane.b32.xlu0 %v1089, 64
        %v1137 = vpop.permute.xlu0 %1136
        %1140 = vrot.lane.b32.xlu0 %v1130, 64
        %v1141 = vpop.permute.xlu0 %1140
        %1142 = vrot.lane.b32.xlu0 %v1131, 64
        %v1143 = vpop.permute.xlu0 %1142
        %v1144 = vsel %vm793, %v1135, 0
        %v1146 = vsel %vm793, %v1137, 0
        %v1148 = vsel %vm793, %v1141, 0
        %v1150 = vsel %vm793, %v1143, 0
        %1152 = vmatprep.subr.mxu0 0.0
        %1153 = vmatpush1.xpose.msra.mxu0 %v1148
        %1154 = vmatprep.subr.mxu0 0.0
        %1155 = vmatpush1.xpose.msra.mxu0 %v1150
        %1156 = vmatprep.subr.mxu0 0.0
        %1157 = vmatpush1.xpose.msra.mxu0 0.0
        %1158 = vmatprep.subr.mxu0 0.0
        %1159 = vmatpush1.xpose.msra.mxu0 0.0
        %1160 = vmatprep.subr.mxu0 0.0
        %1161 = vmatpush1.xpose.msra.mxu0 0.0
        %1162 = vmatprep.subr.mxu0 0.0
        %1163 = vmatpush1.xpose.msra.mxu0 0.0
        %1164 = vmatprep.subr.mxu0 0.0
        %1165 = vmatpush1.xpose.msra.mxu0 0.0
        %1166 = vmatprep.subr.mxu0 0.0
        %1167 = vmatpush1.xpose.msra.mxu0 0.0
        %1168 = vmatprep.subr.mxu0 0.0
        %1169 = vmatpush1.xpose.msra.mxu0 0.0
        %1170 = vmatprep.subr.mxu0 0.0
        %1171 = vmatpush1.xpose.msra.mxu0 0.0
        %1172 = vmatprep.subr.mxu0 0.0
        %1173 = vmatpush1.xpose.msra.mxu0 0.0
        %1174 = vmatprep.subr.mxu0 0.0
        %1175 = vmatpush1.xpose.msra.mxu0 0.0
        %1176 = vmatprep.subr.mxu0 0.0
        %1177 = vmatpush1.xpose.msra.mxu0 0.0
        %1178 = vmatprep.subr.mxu0 0.0
        %1179 = vmatpush1.xpose.msra.mxu0 0.0
        %1180 = vmatprep.subr.mxu0 0.0
        %1181 = vmatpush1.xpose.msra.mxu0 0.0
        %1182 = vmatprep.subr.mxu0 0.0
        %1183 = vmatpush1.xpose.msra.mxu0 0.0
        %1184 = vmatprep.subr.mxu0 0.0
        %1185 = vmatpush1.xpose.msra.mxu0 0.0
        %1186 = vmatprep.subr.mxu0 0.0
        %1187 = vmatpush1.xpose.msra.mxu0 0.0
        %1188 = vmatprep.subr.mxu0 0.0
        %1189 = vmatpush1.xpose.msra.mxu0 0.0
        %1190 = vmatprep.subr.mxu0 0.0
        %1191 = vmatpush1.xpose.msra.mxu0 0.0
        %1192 = vmatprep.subr.mxu0 0.0
        %1193 = vmatpush1.xpose.msra.mxu0 0.0
        %1194 = vmatprep.subr.mxu0 0.0
        %1195 = vmatpush1.xpose.msra.mxu0 0.0
        %1196 = vmatprep.subr.mxu0 0.0
        %1197 = vmatpush1.xpose.msra.mxu0 0.0
        %1198 = vmatprep.subr.mxu0 0.0
        %1199 = vmatpush1.xpose.msra.mxu0 0.0
        %1200 = vmatprep.subr.mxu0 0.0
        %1201 = vmatpush1.xpose.msra.mxu0 0.0
        %1202 = vmatprep.subr.mxu0 0.0
        %1203 = vmatpush1.xpose.msra.mxu0 0.0
        %1204 = vmatprep.subr.mxu0 0.0
        %1205 = vmatpush1.xpose.msra.mxu0 0.0
        %1206 = vmatprep.subr.mxu0 0.0
        %1207 = vmatpush1.xpose.msra.mxu0 0.0
        %1208 = vmatprep.subr.mxu0 0.0
        %1209 = vmatpush1.xpose.msra.mxu0 0.0
        %1210 = vmatprep.subr.mxu0 0.0
        %1211 = vmatpush1.xpose.msra.mxu0 0.0
        %1212 = vmatprep.subr.mxu0 0.0
        %1213 = vmatpush1.xpose.msra.mxu0 0.0
        %1214 = vmatprep.subr.mxu0 0.0
        %1215 = vmatpush1.xpose.msra.mxu0 0.0
        %1216 = vmatprep.mubr.f32.mxu0 0.0
        %1217 = vmatmul.mubr.f32.gmra.mrb[0].mxu0 %v1144
        %v1218 = vpop.f32.mrb[0].mxu0
        %v1219 = vadd.f32 0.0, %v1218
        %v1220 = vpop.f32.mrb[0].mxu0
        %1221 = vmatprep.mubr.f32.mxu0 0.0
        %1222 = vmatmul.mubr.f32.gmra.mrb[0].mxu0 %v1146
        %v1223 = vpop.f32.mrb[0].mxu0
        %v1224 = vadd.f32 0.0, %v1223
        %v1225 = vpop.f32.mrb[0].mxu0
        %1226 = vdwg.mxu0
        %v1227 = vmul.f32 %v1219, 0.0078125
        %v1228 = vmul.f32 %v1224, 0.0078125
        %v1229 = vadd.f32 %v1227, %v940
        %v1230 = vadd.f32 %v1228, %v940
        %v1231 = vsel %vm944, %v1229, -inf
        %1232 = vmax.xlane.f32.xlu0 %v1231
        %v1233 = vpop.xlane.xlu0 %1232
        %v1234 = vsel %vm944, %v1230, -inf
        %1235 = vmax.xlane.f32.xlu0 %v1234
        %v1236 = vpop.xlane.xlu0 %1235
        %v1237 = vsub.f32 %v1229, %v1233
        %v1238 = vsub.f32 %v1230, %v1236
        %v1239 = vmul.f32 %v1237, 1.442695
        %v1240 = vpow.pop %v1239
        %v1241 = vmul.f32 %v1238, 1.442695
        %v1242 = vpow.pop %v1241
        %v1243 = vsel %vm944, %v1240, 0.0
        %1244 = vadd.xlane.f32.xlu0 %v1243
        %v1245 = vpop.xlane.xlu0 %1244
        %v1246 = vsel %vm944, %v1242, 0.0
        %1247 = vadd.xlane.f32.xlu0 %v1246
        %v1248 = vpop.xlane.xlu0 %1247
        %v1249 = vrcp.pop %v1245
        %v1250 = vmul.f32 %v1240, %v1249
        %v1251 = vrcp.pop %v1248
        %v1252 = vmul.f32 %v1242, %v1251
        %1255 = vrot.lane.b32.xlu0 %v766, 64
        %v1256 = vpop.permute.xlu0 %1255
        %1257 = vrot.lane.b32.xlu0 %v771, 64
        %v1258 = vpop.permute.xlu0 %1257
        %v1262 = vsel %vm944, %v1250, 0
        %v1265 = vsel %vm944, %v1252, 0
        %1267 = vmatprep.subr.mxu0 0.0
        %1268 = vmatpush1.msra.mxu0 %v1256
        %1269 = vmatprep.subr.mxu0 0.0
        %1270 = vmatpush1.msra.mxu0 %v1258
        %1271 = vmatprep.subr.mxu0 0.0
        %1272 = vmatpush1.msra.mxu0 0.0
        %1273 = vmatprep.subr.mxu0 0.0
        %1274 = vmatpush1.msra.mxu0 0.0
        %1275 = vmatprep.subr.mxu0 0.0
        %1276 = vmatpush1.msra.mxu0 0.0
        %1277 = vmatprep.subr.mxu0 0.0
        %1278 = vmatpush1.msra.mxu0 0.0
        %1279 = vmatprep.subr.mxu0 0.0
        %1280 = vmatpush1.msra.mxu0 0.0
        %1281 = vmatprep.subr.mxu0 0.0
        %1282 = vmatpush1.msra.mxu0 0.0
        %1283 = vmatprep.subr.mxu0 0.0
        %1284 = vmatpush1.msra.mxu0 0.0
        %1285 = vmatprep.subr.mxu0 0.0
        %1286 = vmatpush1.msra.mxu0 0.0
        %1287 = vmatprep.subr.mxu0 0.0
        %1288 = vmatpush1.msra.mxu0 0.0
        %1289 = vmatprep.subr.mxu0 0.0
        %1290 = vmatpush1.msra.mxu0 0.0
        %1291 = vmatprep.subr.mxu0 0.0
        %1292 = vmatpush1.msra.mxu0 0.0
        %1293 = vmatprep.subr.mxu0 0.0
        %1294 = vmatpush1.msra.mxu0 0.0
        %1295 = vmatprep.subr.mxu0 0.0
        %1296 = vmatpush1.msra.mxu0 0.0
        %1297 = vmatprep.subr.mxu0 0.0
        %1298 = vmatpush1.msra.mxu0 0.0
        %1299 = vmatprep.subr.mxu0 0.0
        %1300 = vmatpush1.msra.mxu0 0.0
        %1301 = vmatprep.subr.mxu0 0.0
        %1302 = vmatpush1.msra.mxu0 0.0
        %1303 = vmatprep.subr.mxu0 0.0
        %1304 = vmatpush1.msra.mxu0 0.0
        %1305 = vmatprep.subr.mxu0 0.0
        %1306 = vmatpush1.msra.mxu0 0.0
        %1307 = vmatprep.subr.mxu0 0.0
        %1308 = vmatpush1.msra.mxu0 0.0
        %1309 = vmatprep.subr.mxu0 0.0
        %1310 = vmatpush1.msra.mxu0 0.0
        %1311 = vmatprep.subr.mxu0 0.0
        %1312 = vmatpush1.msra.mxu0 0.0
        %1313 = vmatprep.subr.mxu0 0.0
        %1314 = vmatpush1.msra.mxu0 0.0
        %1315 = vmatprep.subr.mxu0 0.0
        %1316 = vmatpush1.msra.mxu0 0.0
        %1317 = vmatprep.subr.mxu0 0.0
        %1318 = vmatpush1.msra.mxu0 0.0
        %1319 = vmatprep.subr.mxu0 0.0
        %1320 = vmatpush1.msra.mxu0 0.0
        %1321 = vmatprep.subr.mxu0 0.0
        %1322 = vmatpush1.msra.mxu0 0.0
        %1323 = vmatprep.subr.mxu0 0.0
        %1324 = vmatpush1.msra.mxu0 0.0
        %1325 = vmatprep.subr.mxu0 0.0
        %1326 = vmatpush1.msra.mxu0 0.0
        %1327 = vmatprep.subr.mxu0 0.0
        %1328 = vmatpush1.msra.mxu0 0.0
        %1329 = vmatprep.subr.mxu0 0.0
        %1330 = vmatpush1.msra.mxu0 0.0
        %1331 = vmatprep.mubr.f32.mxu0 0.0
        %1332 = vmatmul.mubr.f32.gmra.mrb[0].mxu0 %v1262
        %v1333 = vpop.f32.mrb[0].mxu0
        %v1334 = vadd.f32 0.0, %v1333
        %v1335 = vpop.f32.mrb[0].mxu0
        %1336 = vmatprep.mubr.f32.mxu0 0.0
        %1337 = vmatmul.mubr.f32.gmra.mrb[0].mxu0 %v1265
        %v1338 = vpop.f32.mrb[0].mxu0
        %v1339 = vadd.f32 0.0, %v1338
        %v1340 = vpop.f32.mrb[0].mxu0
        %1341 = vdwg.mxu0
        %v1343 = vsel %vm793, %v1334, 0
        %v1346 = vsel %vm793, %v1339, 0
        %1348 = vmatprep.subr.mxu0 0.0
        %1349 = vmatpush1.msra.mxu0 %v785
        %1350 = vmatprep.subr.mxu0 0.0
        %1351 = vmatpush1.msra.mxu0 %v786
        %1352 = vmatprep.subr.mxu0 0.0
        %1353 = vmatpush1.msra.mxu0 %v787
        %1354 = vmatprep.subr.mxu0 0.0
        %1355 = vmatpush1.msra.mxu0 %v788
        %1356 = vmatprep.subr.mxu0 0.0
        %1357 = vmatpush1.msra.mxu0 %v789
        %1358 = vmatprep.subr.mxu0 0.0
        %1359 = vmatpush1.msra.mxu0 %v790
        %1360 = vmatprep.subr.mxu0 0.0
        %1361 = vmatpush1.msra.mxu0 %v791
        %1362 = vmatprep.subr.mxu0 0.0
        %1363 = vmatpush1.msra.mxu0 %v792
        %1364 = vmatprep.subr.mxu0 0.0
        %1365 = vmatpush1.msra.mxu0 0.0
        %1366 = vmatprep.subr.mxu0 0.0
        %1367 = vmatpush1.msra.mxu0 0.0
        %1368 = vmatprep.subr.mxu0 0.0
        %1369 = vmatpush1.msra.mxu0 0.0
        %1370 = vmatprep.subr.mxu0 0.0
        %1371 = vmatpush1.msra.mxu0 0.0
        %1372 = vmatprep.subr.mxu0 0.0
        %1373 = vmatpush1.msra.mxu0 0.0
        %1374 = vmatprep.subr.mxu0 0.0
        %1375 = vmatpush1.msra.mxu0 0.0
        %1376 = vmatprep.subr.mxu0 0.0
        %1377 = vmatpush1.msra.mxu0 0.0
        %1378 = vmatprep.subr.mxu0 0.0
        %1379 = vmatpush1.msra.mxu0 0.0
        %1380 = vmatprep.subr.mxu0 0.0
        %1381 = vmatpush1.msra.mxu0 0.0
        %1382 = vmatprep.subr.mxu0 0.0
        %1383 = vmatpush1.msra.mxu0 0.0
        %1384 = vmatprep.subr.mxu0 0.0
        %1385 = vmatpush1.msra.mxu0 0.0
        %1386 = vmatprep.subr.mxu0 0.0
        %1387 = vmatpush1.msra.mxu0 0.0
        %1388 = vmatprep.subr.mxu0 0.0
        %1389 = vmatpush1.msra.mxu0 0.0
        %1390 = vmatprep.subr.mxu0 0.0
        %1391 = vmatpush1.msra.mxu0 0.0
        %1392 = vmatprep.subr.mxu0 0.0
        %1393 = vmatpush1.msra.mxu0 0.0
        %1394 = vmatprep.subr.mxu0 0.0
        %1395 = vmatpush1.msra.mxu0 0.0
        %1396 = vmatprep.subr.mxu0 0.0
        %1397 = vmatpush1.msra.mxu0 0.0
        %1398 = vmatprep.subr.mxu0 0.0
        %1399 = vmatpush1.msra.mxu0 0.0
        %1400 = vmatprep.subr.mxu0 0.0
        %1401 = vmatpush1.msra.mxu0 0.0
        %1402 = vmatprep.subr.mxu0 0.0
        %1403 = vmatpush1.msra.mxu0 0.0
        %1404 = vmatprep.subr.mxu0 0.0
        %1405 = vmatpush1.msra.mxu0 0.0
        %1406 = vmatprep.subr.mxu0 0.0
        %1407 = vmatpush1.msra.mxu0 0.0
        %1408 = vmatprep.subr.mxu0 0.0
        %1409 = vmatpush1.msra.mxu0 0.0
        %1410 = vmatprep.subr.mxu0 0.0
        %1411 = vmatpush1.msra.mxu0 0.0
        %1412 = vmatprep.mubr.f32.mxu0 0.0
        %1413 = vmatmul.mubr.f32.gmra.mrb[0].mxu0 %v1343
        %v1414 = vpop.f32.mrb[0].mxu0
        %v1415 = vadd.f32 0.0, %v1414
        %v1416 = vpop.f32.mrb[0].mxu0
        %1417 = vmatprep.mubr.f32.mxu0 0.0
        %1418 = vmatmul.mubr.f32.gmra.mrb[0].mxu0 %v1346
        %v1419 = vpop.f32.mrb[0].mxu0
        %v1420 = vadd.f32 0.0, %v1419
        %v1421 = vpop.f32.mrb[0].mxu0
        %1422 = vdwg.mxu0
        %v1424 = vsel %vm793, %v1040, 0
        %v1427 = vsel %vm793, %v1045, 0
        %1429 = vmatprep.subr.mxu0 0.0
        %1430 = vmatpush1.msra.mxu0 %v777
        %1431 = vmatprep.subr.mxu0 0.0
        %1432 = vmatpush1.msra.mxu0 %v778
        %1433 = vmatprep.subr.mxu0 0.0
        %1434 = vmatpush1.msra.mxu0 %v779
        %1435 = vmatprep.subr.mxu0 0.0
        %1436 = vmatpush1.msra.mxu0 %v780
        %1437 = vmatprep.subr.mxu0 0.0
        %1438 = vmatpush1.msra.mxu0 %v781
        %1439 = vmatprep.subr.mxu0 0.0
        %1440 = vmatpush1.msra.mxu0 %v782
        %1441 = vmatprep.subr.mxu0 0.0
        %1442 = vmatpush1.msra.mxu0 %v783
        %1443 = vmatprep.subr.mxu0 0.0
        %1444 = vmatpush1.msra.mxu0 %v784
        %1445 = vmatprep.subr.mxu0 0.0
        %1446 = vmatpush1.msra.mxu0 0.0
        %1447 = vmatprep.subr.mxu0 0.0
        %1448 = vmatpush1.msra.mxu0 0.0
        %1449 = vmatprep.subr.mxu0 0.0
        %1450 = vmatpush1.msra.mxu0 0.0
        %1451 = vmatprep.subr.mxu0 0.0
        %1452 = vmatpush1.msra.mxu0 0.0
        %1453 = vmatprep.subr.mxu0 0.0
        %1454 = vmatpush1.msra.mxu0 0.0
        %1455 = vmatprep.subr.mxu0 0.0
        %1456 = vmatpush1.msra.mxu0 0.0
        %1457 = vmatprep.subr.mxu0 0.0
        %1458 = vmatpush1.msra.mxu0 0.0
        %1459 = vmatprep.subr.mxu0 0.0
        %1460 = vmatpush1.msra.mxu0 0.0
        %1461 = vmatprep.subr.mxu0 0.0
        %1462 = vmatpush1.msra.mxu0 0.0
        %1463 = vmatprep.subr.mxu0 0.0
        %1464 = vmatpush1.msra.mxu0 0.0
        %1465 = vmatprep.subr.mxu0 0.0
        %1466 = vmatpush1.msra.mxu0 0.0
        %1467 = vmatprep.subr.mxu0 0.0
        %1468 = vmatpush1.msra.mxu0 0.0
        %1469 = vmatprep.subr.mxu0 0.0
        %1470 = vmatpush1.msra.mxu0 0.0
        %1471 = vmatprep.subr.mxu0 0.0
        %1472 = vmatpush1.msra.mxu0 0.0
        %1473 = vmatprep.subr.mxu0 0.0
        %1474 = vmatpush1.msra.mxu0 0.0
        %1475 = vmatprep.subr.mxu0 0.0
        %1476 = vmatpush1.msra.mxu0 0.0
        %1477 = vmatprep.subr.mxu0 0.0
        %1478 = vmatpush1.msra.mxu0 0.0
        %1479 = vmatprep.subr.mxu0 0.0
        %1480 = vmatpush1.msra.mxu0 0.0
        %1481 = vmatprep.subr.mxu0 0.0
        %1482 = vmatpush1.msra.mxu0 0.0
        %1483 = vmatprep.subr.mxu0 0.0
        %1484 = vmatpush1.msra.mxu0 0.0
        %1485 = vmatprep.subr.mxu0 0.0
        %1486 = vmatpush1.msra.mxu0 0.0
        %1487 = vmatprep.subr.mxu0 0.0
        %1488 = vmatpush1.msra.mxu0 0.0
        %1489 = vmatprep.subr.mxu0 0.0
        %1490 = vmatpush1.msra.mxu0 0.0
        %1491 = vmatprep.subr.mxu0 0.0
        %1492 = vmatpush1.msra.mxu0 0.0
        %1493 = vmatprep.mubr.f32.mxu0 0.0
        %1494 = vmatmul.mubr.f32.gmra.mrb[0].mxu0 %v1424
        %v1495 = vpop.f32.mrb[0].mxu0
        %v1496 = vadd.f32 %v1415, %v1495
        %v1497 = vpop.f32.mrb[0].mxu0
        %1498 = vmatprep.mubr.f32.mxu0 0.0
        %1499 = vmatmul.mubr.f32.gmra.mrb[0].mxu0 %v1427
        %v1500 = vpop.f32.mrb[0].mxu0
        %v1501 = vadd.f32 %v1420, %v1500
        %v1502 = vpop.f32.mrb[0].mxu0
        %1503 = vdwg.mxu0
        %v1504 = vld [vmem:[%s10] sm:$0x1]
        %v1506 = vlaneseq
        %v1507 = vshrl.u32 %v1506, 7
        %v1508 = vsub.s32 0, %v1507
        %v1509 = vrot.slane %v1504, %v1508
        %v1511 = vadd.f32 %v1496, %v1509
        %v1512 = vadd.f32 %v1501, %v1509
        %v1513 = vld [vmem:[%s477] sm:$0xff]
        %v1514 = vld [vmem:[%s477 + $0x8] sm:$0xff]
        %1516 = vset.pattern.permute.xlu0 0
        %1517 = vperm.xlu0 %1516, %v1513
        %v1518 = vpop.permute.xlu0 %1517
        %1521 = vset.pattern.permute.xlu0 0
        %1522 = vperm.xlu0 %1521, %v1514
        %v1523 = vpop.permute.xlu0 %1522
        %v1525 = vmul.f32 %v1511, %v1518
        %v1526 = vmul.f32 %v1512, %v1523
        %1527 = vst [vmem:[%s464] sm:$0xff] %v1525
        %1528 = vst [vmem:[%s464 + $0x8] sm:$0xff] %v1526
        %s1529 = sand.u32 %s282, 1
        %s1530 = scalar_lea.sflag [#allocation4], %s1529
        %s1531 = sand.u32 %s282, 1
        %s1532 = smul.addr %s1531, 16
        %s1533 = scalar_lea.vmem [#allocation10], %s1532
        // Predicated region
        $region81: #{tpu_custom_call.1} parent=63 // pred_check
          %p1534 = pneg %p292
        $region82: #{tpu_custom_call.1} parent=63 // pred_check_branch
          %1536 = sbr.rel (%p1534) target = $region84
        $region83: #{tpu_custom_call.1} parent=63 // pred_region
          %s1538 = ssub.s32 256, 256
          %1539 = vsyncadd %s1530, %s1538
          %s1540 = smul.addr %s28, 2
          %s1541 = smul.addr %s1540, 128
          %s1542 = scalar_lea.hbm %s11, %s1541
          %s1543 = sshll.u32 %s1533, 4
          %s1544 = int_to_ptr.vmem [resolvable:$true] %s1543
          %1549 = dma.vmem_to_hbm [thread:$0]  %s1544, 256, %s1542, %s1530, 128, 128, 8
        $region84: #{tpu_custom_call.1} parent=63 // pred_fallthru
          _
      $region64: #{tpu_custom_call.1} parent=5 // pred_fallthru
        _
      %p1550 = scmp.le.s32.totalorder 2, %s23
      // Predicated region
      $region85: #{tpu_custom_call.1} parent=5 // pred_check
        %p1551 = pneg %p1550
      $region86: #{tpu_custom_call.1} parent=5 // pred_check_branch
        %1553 = sbr.rel (%p1551) target = $region88
      $region87: #{tpu_custom_call.1} parent=5 // pred_region
        %s1554 = ssub.s32 %s23, 2
        // Predicated region
        $region89: #{tpu_custom_call.1} parent=87 // pred_check
          %p1555 = pneg %p298
        $region90: #{tpu_custom_call.1} parent=87 // pred_check_branch
          %1557 = sbr.rel (%p1555) target = $region92
        $region91: #{tpu_custom_call.1} parent=87 // pred_region
          %s1558 = sand.u32 %s283, 1
          %s1559 = scalar_lea.sflag [#allocation4], %s1558
          %s1560 = sand.u32 %s283, 1
          %s1561 = smul.addr %s1560, 16
          %s1562 = scalar_lea.vmem [#allocation10], %s1561
          %1563 = dma.done %s1559, 256
        $region92: #{tpu_custom_call.1} parent=87 // pred_fallthru
          _
      $region88: #{tpu_custom_call.1} parent=5 // pred_fallthru
        _
    $region6: #{tpu_custom_call.1} parent=1 // loop_footer
      %s27 = sadd.s32 1, %s23
    $region7: #{tpu_custom_call.1} parent=1 // loop_footer_branch
      %22 = sbr.rel target = $region3
    $region8: #{tpu_custom_call.1} parent=1 // loop_exit
      _
    %1564 = vsyncpa [#allocation3], 1
    %s1565 = scalar_lea.sflag [#allocation3], 1
    %1566 = vsyncpa %s1565, 1
    %1567 = vsyncpa [#allocation6], 1
    %1568 = vsyncpa [#allocation9], 1
    %1569 = vsyncpa [#allocation4], 1
    %s1570 = scalar_lea.sflag [#allocation4], 1
    %1571 = vsyncpa %s1570, 1

</llo_original>
